<compile_context>
chip_gen: v7x
topology: tpu7x:2x2x1
jax: 0.10.0
libtpu: 0.0.40
codegen_flags: <defaults>
</compile_context>

<pallas_src>
import jax
import jax.numpy as jnp
from jax import lax
from jax.experimental import pallas as pl
from jax.experimental.pallas import tpu as pltpu


def _softplus(x):
    # numerically stable softplus: max(x,0) + log1p(exp(-|x|))
    return jnp.maximum(x, 0.0) + jnp.log1p(jnp.exp(-jnp.abs(x)))


def mi_kernel(x_ref, w1_ref, b1_ref, w2_ref, b2_ref, w3_ref, b3_ref,
              out_ref, h1_ref, acc_ref):
    """Fused MIEstimator forward, N-tiled over w2's columns.

    Grid axis 0 (reduction, "arbitrary"): column tiles of w2.

    x_ref  : [2B, D]  f32   rows 0:B = [cz|vz], rows B:2B = [roll(cz,1,0)|vz]
    w1_ref : [D, H1]  bf16  (resident across the grid)
    b1_ref : [1, H1]  f32   (resident)
    w2_ref : [H1, TN] bf16  column tile j of w2
    b2_ref : [1, TN]  f32   column tile j of b2
    w3_ref : [1, TN]  f32   column tile j of w3 (row layout)
    b3_ref : [1, 1]   f32
    out_ref: [1, 2]   f32   [mi, aux]
    h1_ref : VMEM [2B, H1] f32 scratch  (layer-1 activations, computed once)
    acc_ref: VMEM [2B, 1]  f32 scratch  (layer-3 partial sum accumulator)
    """
    j = pl.program_id(0)

    # ---- layer 1: computed once, resident for every column tile of layer 2.
    @pl.when(j == 0)
    def _():
        h1 = jnp.dot(x_ref[...].astype(jnp.bfloat16), w1_ref[...],
                     preferred_element_type=jnp.float32) + b1_ref[...]
        h1_ref[...] = jnp.maximum(h1, 0.0)            # f32 ReLU
        acc_ref[...] = jnp.zeros_like(acc_ref)

    # ---- layer 2 column tile j (bf16 weights streamed, f32 accumulation) ---
    h2 = jnp.dot(h1_ref[...].astype(jnp.bfloat16), w2_ref[...],
                 preferred_element_type=jnp.float32) + b2_ref[...]
    h2 = jnp.maximum(h2, 0.0)                         # [2B, TN]

    # ---- layer 3 (N=1): VPU multiply + cross-lane reduce, accumulated ------
    acc_ref[...] += jnp.sum(h2 * w3_ref[...], axis=-1, keepdims=True)

    # ---- epilogue: softplus / exp / means on the last tile -----------------
    @pl.when(j == pl.num_programs(0) - 1)
    def _():
        out = acc_ref[...] + b3_ref[...]              # [2B, 1]
        b = out.shape[0] // 2
        pos = out[:b, :]                              # [B, 1]
        neg = out[b:, :]                              # [B, 1]
        inv_b = 1.0 / b
        sp = _softplus(-pos) + _softplus(neg)         # [B, 1]
        mi = -jnp.sum(sp, axis=0, keepdims=True) * inv_b               # [1,1]
        aux = (jnp.sum(pos - jnp.exp(neg), axis=0, keepdims=True) * inv_b
               + 1.0)                                                   # [1,1]
        # Merge into one [1, 2] row without a tiny lane-concatenate.
        lane = lax.broadcasted_iota(jnp.int32, (1, 2), dimension=1)
        out_ref[...] = jnp.where(lane == 0, mi, aux)


def prepare_mi_params(params):
    """One-time weight prep.  Cache the result across training steps —
    re-doing the f32->bf16 cast of w2 every call costs more HBM traffic than
    the kernel itself streams."""
    w1, b1, w2, b2, w3, b3 = params
    H1 = w1.shape[1]
    return (
        w1.astype(jnp.bfloat16),                    # [D, H1]
        b1.reshape(1, H1).astype(jnp.float32),      # [1, H1]
        w2.astype(jnp.bfloat16),                    # [H1, H1]
        b2.reshape(1, H1).astype(jnp.float32),      # [1, H1]
        w3.reshape(1, H1).astype(jnp.float32),      # [1, H1] row layout
        b3.reshape(1, 1).astype(jnp.float32),       # [1, 1]
    )


def mi_estimator_forward(cz, vz, prep, *, tile_n=512):
    """Pallas-backed MIEstimator.forward.

    cz: [B, Hc] float32, vz: [B, Hv] float32.
    prep: output of prepare_mi_params (cached across steps).
    Returns (mi_scalar, aux_scalar) as float32 scalars.
    """
    w1b, b1, w2b, b2, w3r, b3 = prep
    B = cz.shape[0]
    D, H1 = w1b.shape
    assert cz.shape[1] + vz.shape[1] == D

    tile_n = min(tile_n, H1)
    assert H1 % tile_n == 0 and tile_n % 128 == 0
    num_tiles = H1 // tile_n

    # Stacked input [cz|vz ; roll(cz,1,0)|vz]: tiny (~8 KiB), built per call.
    pos_in = jnp.concatenate([cz, vz], axis=1)
    neg_in = jnp.concatenate([jnp.roll(cz, 1, axis=0), vz], axis=1)
    x = jnp.concatenate([pos_in, neg_in], axis=0).astype(jnp.float32)  # [2B,D]

    const = lambda shape: pl.BlockSpec(shape, lambda j: (0,) * len(shape))

    out = pl.pallas_call(
        mi_kernel,
        out_shape=jax.ShapeDtypeStruct((1, 2), jnp.float32),
        grid_spec=pltpu.PrefetchScalarGridSpec(
            num_scalar_prefetch=0,
            grid=(num_tiles,),
            in_specs=[
                const((2 * B, D)),                              # x   (resident)
                const((D, H1)),                                 # w1  bf16 (resident)
                const((1, H1)),                                 # b1  (resident)
                pl.BlockSpec((H1, tile_n), lambda j: (0, j)),   # w2 tile (bf16)
                pl.BlockSpec((1, tile_n), lambda j: (0, j)),    # b2 tile
                pl.BlockSpec((1, tile_n), lambda j: (0, j)),    # w3 row tile
                const((1, 1)),                                  # b3
            ],
            out_specs=pl.BlockSpec((1, 2), lambda j: (0, 0)),
            scratch_shapes=[
                pltpu.VMEM((2 * B, H1), jnp.float32),           # h1 activations
                pltpu.VMEM((2 * B, 1), jnp.float32),            # layer-3 acc
            ],
        ),
        compiler_params=pltpu.CompilerParams(
            dimension_semantics=("arbitrary",),                 # reduction axis
        ),
    )(x, w1b, b1, w2b, b2, w3r, b3)

    return out[0, 0], out[0, 1]


def reference_forward_f32(cz, vz, params):
    """Pure-JAX, full-f32 reference matching the PyTorch module semantics."""
    w1, b1, w2, b2, w3, b3 = params

    def net(x):
        h = jax.nn.relu(x @ w1 + b1)
        h = jax.nn.relu(h @ w2 + b2)
        return h @ w3 + b3

    pos = net(jnp.concatenate([cz, vz], axis=1))
    neg = net(jnp.concatenate([jnp.roll(cz, 1, axis=0), vz], axis=1))
    mi = -jnp.mean(jax.nn.softplus(-pos)) - jnp.mean(jax.nn.softplus(neg))
    aux = jnp.mean(pos) - jnp.mean(jnp.exp(neg)) + 1.0
    return mi, aux


def reference_forward_bf16(cz, vz, params):
    """Pure-JAX reference mirroring the kernel's mixed-precision math."""
    w1, b1, w2, b2, w3, b3 = params
    w1b = w1.astype(jnp.bfloat16)
    w2b = w2.astype(jnp.bfloat16)
    w3r = w3.reshape(1, -1)

    def net(x):
        h = jnp.dot(x.astype(jnp.bfloat16), w1b,
                    preferred_element_type=jnp.float32) + b1
        h = jnp.maximum(h, 0.0)
        h = jnp.dot(h.astype(jnp.bfloat16), w2b,
                    preferred_element_type=jnp.float32) + b2
        h = jnp.maximum(h, 0.0)
        return jnp.sum(h * w3r, axis=-1, keepdims=True) + b3

    pos = net(jnp.concatenate([cz, vz], axis=1))
    neg = net(jnp.concatenate([jnp.roll(cz, 1, axis=0), vz], axis=1))
    mi = -jnp.mean(jax.nn.softplus(-pos)) - jnp.mean(jax.nn.softplus(neg))
    aux = jnp.mean(pos) - jnp.mean(jnp.exp(neg)) + 1.0
    return mi, aux


def make_params(key, in_dim, hidden=1024):
    """Deterministic synthetic init (no checkpoint load). f32 master weights."""
    k1, k2, k3 = jax.random.split(key, 3)
    scale1 = 1.0 / jnp.sqrt(in_dim)
    scale2 = 1.0 / jnp.sqrt(hidden)
    w1 = jax.random.normal(k1, (in_dim, hidden), jnp.float32) * scale1
    b1 = jnp.zeros((1, hidden), jnp.float32)
    w2 = jax.random.normal(k2, (hidden, hidden), jnp.float32) * scale2
    b2 = jnp.zeros((1, hidden), jnp.float32)
    w3 = jax.random.normal(k3, (hidden, 1), jnp.float32) * scale2
    b3 = jnp.zeros((1, 1), jnp.float32)
    return (w1, b1, w2, b2, w3, b3)


if __name__ == "__main__":
    # Small shapes consistent with the module:
    #   args.hidden_dim = 32, args.vspecific.hidden_dims[-1] = 8
    #   => cz: [B, 32], vz: [B, 8*4] = [B, 32], MLP input dim = 64, hidden 1024.
    B = 8
    hidden_dim = 32
    vspecific_last = 8
    vz_dim = vspecific_last * 4
    in_dim = hidden_dim + vz_dim

    key = jax.random.PRNGKey(0)
    k_cz, k_vz, k_params = jax.random.split(key, 3)
    cz = jax.random.normal(k_cz, (B, hidden_dim), jnp.float32)
    vz = jax.random.normal(k_vz, (B, vz_dim), jnp.float32)
    params = make_params(k_params, in_dim, hidden=1024)

    # One-time weight prep (cached across steps in a real training loop).
    prep = jax.block_until_ready(prepare_mi_params(params))

    mi, aux = mi_estimator_forward(cz, vz, prep)
    mi, aux = jax.block_until_ready((mi, aux))

    # Strict check against a reference using the same bf16-weight/activation,
    # f32-accumulation math as the kernel.
    mi_bf, aux_bf = reference_forward_bf16(cz, vz, params)
    assert jnp.allclose(mi, mi_bf, atol=1e-3, rtol=1e-3), (mi, mi_bf)
    assert jnp.allclose(aux, aux_bf, atol=1e-3, rtol=1e-3), (aux, aux_bf)

    # Loose check against the full-f32 module semantics (bf16 streaming only
    # perturbs the result at the ~1e-2 level for these scales).
    mi_f32, aux_f32 = reference_forward_f32(cz, vz, params)
    assert jnp.allclose(mi, mi_f32, atol=5e-2, rtol=5e-2), (mi, mi_f32)
    assert jnp.allclose(aux, aux_f32, atol=5e-2, rtol=5e-2), (aux, aux_f32)

    print("KERNEL_OK")
</pallas_src>

<mosaic_0001>
module attributes {stable_mosaic.version = 11 : i64} {
  func.func @mi_kernel(%arg0: i32, %arg1: memref<16x64xf32, #tpu.memory_space<vmem>>, %arg2: memref<64x1024xbf16, #tpu.memory_space<vmem>>, %arg3: memref<1x1024xf32, #tpu.memory_space<vmem>>, %arg4: memref<1024x512xbf16, #tpu.memory_space<vmem>>, %arg5: memref<1x512xf32, #tpu.memory_space<vmem>>, %arg6: memref<1x512xf32, #tpu.memory_space<vmem>>, %arg7: memref<1x1xf32, #tpu.memory_space<vmem>>, %arg8: memref<1x2xf32, #tpu.memory_space<vmem>>, %arg9: memref<16x1024xf32, #tpu.memory_space<vmem>>, %arg10: memref<16x1xf32, #tpu.memory_space<vmem>>) attributes {dimension_semantics = [#tpu.dimension_semantics<arbitrary>], iteration_bounds = array<i64: 2>, scalar_prefetch = 0 : i64, scratch_operands = 2 : i64, tpu.core_type = #tpu.core_type<tc>, window_params = [{pipeline_mode = #tpu.pipeline_mode<synchronous>, transform_indices = @transform_0, window_bounds = array<i64: 16, 64>}, {pipeline_mode = #tpu.pipeline_mode<synchronous>, transform_indices = @transform_1, window_bounds = array<i64: 64, 1024>}, {pipeline_mode = #tpu.pipeline_mode<synchronous>, transform_indices = @transform_2, window_bounds = array<i64: 1, 1024>}, {transform_indices = @transform_3, window_bounds = array<i64: 1024, 512>}, {transform_indices = @transform_4, window_bounds = array<i64: 1, 512>}, {transform_indices = @transform_5, window_bounds = array<i64: 1, 512>}, {pipeline_mode = #tpu.pipeline_mode<synchronous>, transform_indices = @transform_6, window_bounds = array<i64: 1, 1>}, {pipeline_mode = #tpu.pipeline_mode<synchronous>, transform_indices = @transform_7, window_bounds = array<i64: 1, 2>}]} {
    %c0_i32 = arith.constant 0 : i32
    %0 = arith.cmpi eq, %arg0, %c0_i32 : i32
    %1 = arith.extui %0 : i1 to i32
    %c0_i32_0 = arith.constant 0 : i32
    %2 = arith.cmpi ne, %1, %c0_i32_0 : i32
    scf.if %2 {
      %c0_15 = arith.constant 0 : index
      %c0_16 = arith.constant 0 : index
      %23 = vector.load %arg1[%c0_15, %c0_16] : memref<16x64xf32, #tpu.memory_space<vmem>>, vector<16x64xf32>
      %24 = arith.truncf %23 : vector<16x64xf32> to vector<16x64xbf16>
      %c0_17 = arith.constant 0 : index
      %c0_18 = arith.constant 0 : index
      %25 = vector.load %arg2[%c0_17, %c0_18] : memref<64x1024xbf16, #tpu.memory_space<vmem>>, vector<64x1024xbf16>
      %cst_19 = arith.constant dense<0.000000e+00> : vector<16x1024xf32>
      %26 = tpu.matmul %24, %25, %cst_19 {dimension_numbers = #tpu.dot_dimension_numbers<[1], [0], [0], [1], [0, 0, 1, 1], [], []>} : vector<16x64xbf16>, vector<64x1024xbf16>, vector<16x1024xf32> -> vector<16x1024xf32>
      %c0_20 = arith.constant 0 : index
      %c0_21 = arith.constant 0 : index
      %27 = vector.load %arg3[%c0_20, %c0_21] : memref<1x1024xf32, #tpu.memory_space<vmem>>, vector<1x1024xf32>
      %28 = vector.broadcast %27 : vector<1x1024xf32> to vector<16x1024xf32>
      %29 = arith.addf %26, %28 : vector<16x1024xf32>
      %cst_22 = arith.constant 0.000000e+00 : f32
      %30 = vector.broadcast %cst_22 : f32 to vector<16x1024xf32>
      %31 = arith.maximumf %29, %30 : vector<16x1024xf32>
      %c0_23 = arith.constant 0 : index
      %c0_24 = arith.constant 0 : index
      %32 = vector.load %arg9[%c0_23, %c0_24] : memref<16x1024xf32, #tpu.memory_space<vmem>>, vector<16x1024xf32>
      tpu.vector_store %arg9[%c0_23, %c0_24], %31 {strides = array<i32>} : memref<16x1024xf32, #tpu.memory_space<vmem>>, vector<16x1024xf32>,
      %cst_25 = arith.constant 0.000000e+00 : f32
      %33 = vector.broadcast %cst_25 : f32 to vector<16x1xf32>
      %c0_26 = arith.constant 0 : index
      %c0_27 = arith.constant 0 : index
      %34 = vector.load %arg10[%c0_26, %c0_27] : memref<16x1xf32, #tpu.memory_space<vmem>>, vector<16x1xf32>
      tpu.vector_store %arg10[%c0_26, %c0_27], %33 {strides = array<i32>} : memref<16x1xf32, #tpu.memory_space<vmem>>, vector<16x1xf32>,
    } else {
    }
    %c0 = arith.constant 0 : index
    %c0_1 = arith.constant 0 : index
    %3 = vector.load %arg9[%c0, %c0_1] : memref<16x1024xf32, #tpu.memory_space<vmem>>, vector<16x1024xf32>
    %4 = arith.truncf %3 : vector<16x1024xf32> to vector<16x1024xbf16>
    %c0_2 = arith.constant 0 : index
    %c0_3 = arith.constant 0 : index
    %5 = vector.load %arg4[%c0_2, %c0_3] : memref<1024x512xbf16, #tpu.memory_space<vmem>>, vector<1024x512xbf16>
    %cst = arith.constant dense<0.000000e+00> : vector<16x512xf32>
    %6 = tpu.matmul %4, %5, %cst {dimension_numbers = #tpu.dot_dimension_numbers<[1], [0], [0], [1], [0, 0, 1, 1], [], []>} : vector<16x1024xbf16>, vector<1024x512xbf16>, vector<16x512xf32> -> vector<16x512xf32>
    %c0_4 = arith.constant 0 : index
    %c0_5 = arith.constant 0 : index
    %7 = vector.load %arg5[%c0_4, %c0_5] : memref<1x512xf32, #tpu.memory_space<vmem>>, vector<1x512xf32>
    %8 = vector.broadcast %7 : vector<1x512xf32> to vector<16x512xf32>
    %9 = arith.addf %6, %8 : vector<16x512xf32>
    %cst_6 = arith.constant 0.000000e+00 : f32
    %10 = vector.broadcast %cst_6 : f32 to vector<16x512xf32>
    %11 = arith.maximumf %9, %10 : vector<16x512xf32>
    %c0_7 = arith.constant 0 : index
    %c0_8 = arith.constant 0 : index
    %12 = vector.load %arg10[%c0_7, %c0_8] : memref<16x1xf32, #tpu.memory_space<vmem>>, vector<16x1xf32>
    %c0_9 = arith.constant 0 : index
    %c0_10 = arith.constant 0 : index
    %13 = vector.load %arg6[%c0_9, %c0_10] : memref<1x512xf32, #tpu.memory_space<vmem>>, vector<1x512xf32>
    %14 = vector.broadcast %13 : vector<1x512xf32> to vector<16x512xf32>
    %15 = arith.mulf %11, %14 : vector<16x512xf32>
    %cst_11 = arith.constant dense<0.000000e+00> : vector<16xf32>
    %16 = vector.multi_reduction <add>, %15, %cst_11 [1] : vector<16x512xf32> to vector<16xf32>
    %17 = vector.shape_cast %16 : vector<16xf32> to vector<16x1xf32>
    %18 = arith.addf %12, %17 : vector<16x1xf32>
    %c0_12 = arith.constant 0 : index
    %c0_13 = arith.constant 0 : index
    %19 = vector.load %arg10[%c0_12, %c0_13] : memref<16x1xf32, #tpu.memory_space<vmem>>, vector<16x1xf32>
    tpu.vector_store %arg10[%c0_12, %c0_13], %18 {strides = array<i32>} : memref<16x1xf32, #tpu.memory_space<vmem>>, vector<16x1xf32>,
    %c1_i32 = arith.constant 1 : i32
    %20 = arith.cmpi eq, %arg0, %c1_i32 : i32
    %21 = arith.extui %20 : i1 to i32
    %c0_i32_14 = arith.constant 0 : i32
    %22 = arith.cmpi ne, %21, %c0_i32_14 : i32
    scf.if %22 {
      %c0_15 = arith.constant 0 : index
      %c0_16 = arith.constant 0 : index
      %23 = vector.load %arg10[%c0_15, %c0_16] : memref<16x1xf32, #tpu.memory_space<vmem>>, vector<16x1xf32>
      %c0_17 = arith.constant 0 : index
      %c0_18 = arith.constant 0 : index
      %24 = vector.load %arg7[%c0_17, %c0_18] : memref<1x1xf32, #tpu.memory_space<vmem>>, vector<1x1xf32>
      %25 = vector.broadcast %24 : vector<1x1xf32> to vector<16x1xf32>
      %26 = arith.addf %23, %25 : vector<16x1xf32>
      %27 = vector.extract_strided_slice %26 {offsets = [0, 0], sizes = [8, 1], strides = [1, 1]} : vector<16x1xf32> to vector<8x1xf32>
      %28 = vector.extract_strided_slice %26 {offsets = [8, 0], sizes = [8, 1], strides = [1, 1]} : vector<16x1xf32> to vector<8x1xf32>
      %cst_19 = arith.constant 0.000000e+00 : f32
      %29 = vector.broadcast %cst_19 : f32 to vector<8x1xf32>
      %30 = arith.subf %29, %27 : vector<8x1xf32>
      %cst_20 = arith.constant 0.000000e+00 : f32
      %31 = vector.broadcast %cst_20 : f32 to vector<8x1xf32>
      %32 = arith.maximumf %30, %31 : vector<8x1xf32>
      %33 = math.absf %30 : vector<8x1xf32>
      %cst_21 = arith.constant 0.000000e+00 : f32
      %34 = vector.broadcast %cst_21 : f32 to vector<8x1xf32>
      %35 = arith.subf %34, %33 : vector<8x1xf32>
      %36 = math.exp %35 : vector<8x1xf32>
      %37 = math.log1p %36 : vector<8x1xf32>
      %38 = arith.addf %32, %37 : vector<8x1xf32>
      %cst_22 = arith.constant 0.000000e+00 : f32
      %39 = vector.broadcast %cst_22 : f32 to vector<8x1xf32>
      %40 = arith.maximumf %28, %39 : vector<8x1xf32>
      %41 = math.absf %28 : vector<8x1xf32>
      %cst_23 = arith.constant 0.000000e+00 : f32
      %42 = vector.broadcast %cst_23 : f32 to vector<8x1xf32>
      %43 = arith.subf %42, %41 : vector<8x1xf32>
      %44 = math.exp %43 : vector<8x1xf32>
      %45 = math.log1p %44 : vector<8x1xf32>
      %46 = arith.addf %40, %45 : vector<8x1xf32>
      %47 = arith.addf %38, %46 : vector<8x1xf32>
      %cst_24 = arith.constant dense<0.000000e+00> : vector<1xf32>
      %48 = vector.multi_reduction <add>, %47, %cst_24 [0] : vector<8x1xf32> to vector<1xf32>
      %49 = vector.shape_cast %48 : vector<1xf32> to vector<1x1xf32>
      %cst_25 = arith.constant 0.000000e+00 : f32
      %50 = vector.broadcast %cst_25 : f32 to vector<1x1xf32>
      %51 = arith.subf %50, %49 : vector<1x1xf32>
      %cst_26 = arith.constant 1.250000e-01 : f32
      %52 = vector.broadcast %cst_26 : f32 to vector<1x1xf32>
      %53 = arith.mulf %51, %52 : vector<1x1xf32>
      %54 = math.exp %28 : vector<8x1xf32>
      %55 = arith.subf %27, %54 : vector<8x1xf32>
      %cst_27 = arith.constant dense<0.000000e+00> : vector<1xf32>
      %56 = vector.multi_reduction <add>, %55, %cst_27 [0] : vector<8x1xf32> to vector<1xf32>
      %57 = vector.shape_cast %56 : vector<1xf32> to vector<1x1xf32>
      %cst_28 = arith.constant 1.250000e-01 : f32
      %58 = vector.broadcast %cst_28 : f32 to vector<1x1xf32>
      %59 = arith.mulf %57, %58 : vector<1x1xf32>
      %cst_29 = arith.constant 1.000000e+00 : f32
      %60 = vector.broadcast %cst_29 : f32 to vector<1x1xf32>
      %61 = arith.addf %59, %60 : vector<1x1xf32>
      %62 = tpu.iota {dimensions = array<i32: 1>} : vector<1x2xi32>
      %c0_i32_30 = arith.constant 0 : i32
      %63 = vector.broadcast %c0_i32_30 : i32 to vector<1x2xi32>
      %64 = arith.cmpi eq, %62, %63 : vector<1x2xi32>
      %65 = vector.shape_cast %53 : vector<1x1xf32> to vector<1x1xf32>
      %66 = vector.broadcast %65 : vector<1x1xf32> to vector<1x2xf32>
      %67 = vector.shape_cast %61 : vector<1x1xf32> to vector<1x1xf32>
      %68 = vector.broadcast %67 : vector<1x1xf32> to vector<1x2xf32>
      %69 = arith.select %64, %66, %68 : vector<1x2xi1>, vector<1x2xf32>
      %c0_31 = arith.constant 0 : index
      %c0_32 = arith.constant 0 : index
      %70 = vector.load %arg8[%c0_31, %c0_32] : memref<1x2xf32, #tpu.memory_space<vmem>>, vector<1x2xf32>
      tpu.vector_store %arg8[%c0_31, %c0_32], %69 {strides = array<i32>} : memref<1x2xf32, #tpu.memory_space<vmem>>, vector<1x2xf32>,
    } else {
    }
    return
  }
  func.func @transform_0(%arg0: i32) -> (i32, i32) {
    %c0_i32 = arith.constant 0 : i32
    %c0_i32_0 = arith.constant 0 : i32
    %c0_i32_1 = arith.constant 0 : i32
    return %c0_i32, %c0_i32_0 : i32, i32
  }
  func.func @transform_1(%arg0: i32) -> (i32, i32) {
    %c0_i32 = arith.constant 0 : i32
    %c0_i32_0 = arith.constant 0 : i32
    %c0_i32_1 = arith.constant 0 : i32
    return %c0_i32, %c0_i32_0 : i32, i32
  }
  func.func @transform_2(%arg0: i32) -> (i32, i32) {
    %c0_i32 = arith.constant 0 : i32
    %c0_i32_0 = arith.constant 0 : i32
    %c0_i32_1 = arith.constant 0 : i32
    return %c0_i32, %c0_i32_0 : i32, i32
  }
  func.func @transform_3(%arg0: i32) -> (i32, i32) {
    %c0_i32 = arith.constant 0 : i32
    %c0_i32_0 = arith.constant 0 : i32
    return %c0_i32, %arg0 : i32, i32
  }
  func.func @transform_4(%arg0: i32) -> (i32, i32) {
    %c0_i32 = arith.constant 0 : i32
    %c0_i32_0 = arith.constant 0 : i32
    return %c0_i32, %arg0 : i32, i32
  }
  func.func @transform_5(%arg0: i32) -> (i32, i32) {
    %c0_i32 = arith.constant 0 : i32
    %c0_i32_0 = arith.constant 0 : i32
    return %c0_i32, %arg0 : i32, i32
  }
  func.func @transform_6(%arg0: i32) -> (i32, i32) {
    %c0_i32 = arith.constant 0 : i32
    %c0_i32_0 = arith.constant 0 : i32
    %c0_i32_1 = arith.constant 0 : i32
    return %c0_i32, %c0_i32_0 : i32, i32
  }
  func.func @transform_7(%arg0: i32) -> (i32, i32) {
    %c0_i32 = arith.constant 0 : i32
    %c0_i32_0 = arith.constant 0 : i32
    %c0_i32_1 = arith.constant 0 : i32
    return %c0_i32, %c0_i32_0 : i32, i32
  }
}

</mosaic_0001>

<llo_original>
// kernel: tpu_custom_call.1
$region0: #{tpu_custom_call.1}
  #allocation0 [shape = 'u32[]', space=smem, size = 0x4, offset = 0x4, fixed_abs, tag = 'smem constant byte address 0x4 - core index']
  #allocation1 [shape = 'u32[144,128]{1,0:T(1,128)}', space=vmem, size = 0x12000, scoped, tag = 'internal scratch']
  #allocation2 [shape = 'f32[16,1024]{1,0:T(8,128)}', space=vmem, size = 0x10000, scoped, tag = 'scratch operand']
  #allocation3 [shape = 'f32[16,1]{1,0:T(8,128)}', space=vmem, size = 0x2000, scoped, tag = 'scratch operand']
  #allocation4 [shape = 'f32[1,1]{1,0:T(1,128)S(1)}', space=vmem, size = 0x200, scoped, tag = 'scoped memory for tpu_custom_call.1']
  %s0 = inlined_call_operand.hbm [shape: f32[16,64], index: 0, kind: input, shape index: {}]
  %s1 = inlined_call_operand.hbm [shape: bf16[64,1024], index: 1, kind: input, shape index: {}]
  %s2 = inlined_call_operand.hbm [shape: f32[1,1024], index: 2, kind: input, shape index: {}]
  %s3 = inlined_call_operand.hbm [shape: bf16[1024,1024], index: 3, kind: input, shape index: {}]
  %s4 = inlined_call_operand.hbm [shape: f32[1,1024], index: 4, kind: input, shape index: {}]
  %s5 = inlined_call_operand.hbm [shape: f32[1,1024], index: 5, kind: input, shape index: {}]
  %s6 = inlined_call_operand.<no memory space> [shape: f32[1,1], index: 6, kind: input, shape index: {}]
  %s7 = inlined_call_operand.hbm [shape: f32[1,2], index: 7, kind: output, shape index: {}]
  %s8 = sld [smem:[#allocation0]]
  $region93: #{tpu_custom_call.1} parent=0
    _
  %s10 = ssub.s32 1, %s8
  %s11 = scalar_select 0, %s10, %s8
  %v12 = vstv %s6
  %13 = vst [vmem:[#allocation4] sm:$0x1] %v12
  $region1: #{tpu_custom_call.1} parent=0
    #allocation5 [shape = 'u8[8192]{0}', space=vmem, size = 0x2000, scoped, tag = 'input window, operand 0, single buffered']
    #allocation6 [shape = 's32[2]{0}', space=sflag, size = 0x8, scoped, tag = 'scoped memory for tpu_custom_call.1']
    #allocation7 [shape = 's32[2]{0}', space=sflag, size = 0x8, scoped, tag = 'scoped memory for tpu_custom_call.1']
    #allocation8 [shape = 'u8[131072]{0}', space=vmem, size = 0x20000, scoped, tag = 'input window, operand 1, single buffered']
    #allocation9 [shape = 's32[1]{0}', space=sflag, size = 0x4, scoped, tag = 'scoped memory for tpu_custom_call.1']
    #allocation10 [shape = 'u8[4096]{0}', space=vmem, size = 0x1000, scoped, tag = 'input window, operand 2, single buffered']
    #allocation11 [shape = 'u8[2097152]{0}', space=vmem, size = 0x200000, scoped, tag = 'input window, operand 3']
    #allocation12 [shape = 's32[2]{0}', space=sflag, size = 0x8, scoped, tag = 'scoped memory for tpu_custom_call.1']
    #allocation13 [shape = 'u8[4096]{0}', space=vmem, size = 0x1000, scoped, tag = 'input window, operand 4']
    #allocation14 [shape = 'u8[4096]{0}', space=vmem, size = 0x1000, scoped, tag = 'input window, operand 5']
    #allocation15 [shape = 's32[2]{0}', space=sflag, size = 0x8, scoped, tag = 'scoped memory for tpu_custom_call.1']
    #allocation16 [shape = 'u8[512]{0}', space=vmem, size = 0x400, scoped, tag = 'output window, operand 0, single buffered']
    %14 = vsyncpa [#allocation6], 0
    %15 = vsyncpa [#allocation9], 0
    %16 = vsyncpa [#allocation12], 0
    %s17 = scalar_lea.sflag [#allocation12], 1
    %18 = vsyncpa %s17, 0
    %19 = vsyncpa [#allocation15], 0
    %s20 = scalar_lea.sflag [#allocation15], 1
    %21 = vsyncpa %s20, 0
    %22 = vsyncpa [#allocation7], 0
    loop: start=0, step=1, limit=4
    $region2: #{tpu_custom_call.1} parent=1 // loop_pre_header
      _
    $region3: #{tpu_custom_call.1} parent=1 // loop_header
      %s24 = sphi 0, %s28
      %p25 = scmp.ge.s32.totalorder %s24, 4
      %s32 = sphi 0, %s32
      %s34 = sphi 0, %s32
      %s35 = sphi 0, %s34
      %s49 = sphi 0, %s35
      %s53 = sphi 0, %s53
      %s55 = sphi 0, %s53
      %s56 = sphi 0, %s55
      %s70 = sphi 0, %s56
      %s74 = sphi 0, %s74
      %s76 = sphi 0, %s74
      %s77 = sphi 0, %s76
      %s91 = sphi 0, %s77
      %s97 = sphi 0, %s99
      %s100 = sphi 0, %s97
      %s101 = sphi 0, %s100
      %s117 = sphi 0, %s101
      %s123 = sphi 0, %s125
      %s126 = sphi 0, %s123
      %s127 = sphi 0, %s126
      %s143 = sphi 0, %s127
      %s149 = sphi 0, %s151
      %s152 = sphi 0, %s149
      %s153 = sphi 0, %s152
      %s169 = sphi 0, %s153
      %s173 = sphi 0, %s173
      %s175 = sphi 0, %s173
      %s176 = sphi 0, %s175
      %s190 = sphi 0, %s176
      %s194 = sphi 0, %s194
      %s196 = sphi 0, %s194
      %s197 = sphi 0, %s196
      %s211 = sphi 0, %s197
    $region4: #{tpu_custom_call.1} parent=1 // loop_header_branch
      %27 = sbr.rel (%p25) target = $region8
    $region5: #{tpu_custom_call.1} parent=1 // loop_body
      %s29 = ssub.s32 %s24, 1
      %s30 = ssub.s32 %s24, 2
      %s31 = sadd.s32 %s24, 1
      %s33 = sadd.s32 %s32, 1
      %p36 = scmp.eq.s32.totalorder %s24, 1
      %p37 = scmp.ne.s32.totalorder %s32, %s34
      %p38 = scmp.eq.s32.totalorder %s24, 0
      %p39 = por %p37, %p38
      %p40 = scmp.ne.s32.totalorder %s32, %s34
      %p41 = scmp.eq.s32.totalorder %s29, 1
      %p42 = por %p40, %p41
      %p43 = scmp.ne.s32.totalorder %s34, %s35
      %p44 = scmp.eq.s32.totalorder %s29, 0
      %p45 = por %p43, %p44
      %p46 = scmp.ne.s32.totalorder %s34, %s35
      %p47 = scmp.eq.s32.totalorder %s30, 1
      %p48 = por %p46, %p47
      %p50 = scmp.ne.s32.totalorder %s35, %s49
      %p51 = scmp.eq.s32.totalorder %s30, 0
      %p52 = por %p50, %p51
      %s54 = sadd.s32 %s53, 1
      %p57 = scmp.eq.s32.totalorder %s24, 1
      %p58 = scmp.ne.s32.totalorder %s53, %s55
      %p59 = scmp.eq.s32.totalorder %s24, 0
      %p60 = por %p58, %p59
      %p61 = scmp.ne.s32.totalorder %s53, %s55
      %p62 = scmp.eq.s32.totalorder %s29, 1
      %p63 = por %p61, %p62
      %p64 = scmp.ne.s32.totalorder %s55, %s56
      %p65 = scmp.eq.s32.totalorder %s29, 0
      %p66 = por %p64, %p65
      %p67 = scmp.ne.s32.totalorder %s55, %s56
      %p68 = scmp.eq.s32.totalorder %s30, 1
      %p69 = por %p67, %p68
      %p71 = scmp.ne.s32.totalorder %s56, %s70
      %p72 = scmp.eq.s32.totalorder %s30, 0
      %p73 = por %p71, %p72
      %s75 = sadd.s32 %s74, 1
      %p78 = scmp.eq.s32.totalorder %s24, 1
      %p79 = scmp.ne.s32.totalorder %s74, %s76
      %p80 = scmp.eq.s32.totalorder %s24, 0
      %p81 = por %p79, %p80
      %p82 = scmp.ne.s32.totalorder %s74, %s76
      %p83 = scmp.eq.s32.totalorder %s29, 1
      %p84 = por %p82, %p83
      %p85 = scmp.ne.s32.totalorder %s76, %s77
      %p86 = scmp.eq.s32.totalorder %s29, 0
      %p87 = por %p85, %p86
      %p88 = scmp.ne.s32.totalorder %s76, %s77
      %p89 = scmp.eq.s32.totalorder %s30, 1
      %p90 = por %p88, %p89
      %p92 = scmp.ne.s32.totalorder %s77, %s91
      %p93 = scmp.eq.s32.totalorder %s30, 0
      %p94 = por %p92, %p93
      %s95 = ssub.s32 %s24, %s31
      %p96 = scmp.eq.s32.totalorder %s95, 0
      %s98 = sadd.s32 %s97, 1
      %s99 = scalar_select %p96, %s97, %s98
      %p102 = pneg %p96
      %p103 = scmp.eq.s32.totalorder %s24, 1
      %p104 = por %p102, %p103
      %p105 = scmp.ne.s32.totalorder %s97, %s100
      %p106 = scmp.eq.s32.totalorder %s24, 0
      %p107 = por %p105, %p106
      %p108 = scmp.ne.s32.totalorder %s97, %s100
      %p109 = scmp.eq.s32.totalorder %s29, 1
      %p110 = por %p108, %p109
      %p111 = scmp.ne.s32.totalorder %s100, %s101
      %p112 = scmp.eq.s32.totalorder %s29, 0
      %p113 = por %p111, %p112
      %p114 = scmp.ne.s32.totalorder %s100, %s101
      %p115 = scmp.eq.s32.totalorder %s30, 1
      %p116 = por %p114, %p115
      %p118 = scmp.ne.s32.totalorder %s101, %s117
      %p119 = scmp.eq.s32.totalorder %s30, 0
      %p120 = por %p118, %p119
      %s121 = ssub.s32 %s24, %s31
      %p122 = scmp.eq.s32.totalorder %s121, 0
      %s124 = sadd.s32 %s123, 1
      %s125 = scalar_select %p122, %s123, %s124
      %p128 = pneg %p122
      %p129 = scmp.eq.s32.totalorder %s24, 1
      %p130 = por %p128, %p129
      %p131 = scmp.ne.s32.totalorder %s123, %s126
      %p132 = scmp.eq.s32.totalorder %s24, 0
      %p133 = por %p131, %p132
      %p134 = scmp.ne.s32.totalorder %s123, %s126
      %p135 = scmp.eq.s32.totalorder %s29, 1
      %p136 = por %p134, %p135
      %p137 = scmp.ne.s32.totalorder %s126, %s127
      %p138 = scmp.eq.s32.totalorder %s29, 0
      %p139 = por %p137, %p138
      %p140 = scmp.ne.s32.totalorder %s126, %s127
      %p141 = scmp.eq.s32.totalorder %s30, 1
      %p142 = por %p140, %p141
      %p144 = scmp.ne.s32.totalorder %s127, %s143
      %p145 = scmp.eq.s32.totalorder %s30, 0
      %p146 = por %p144, %p145
      %s147 = ssub.s32 %s24, %s31
      %p148 = scmp.eq.s32.totalorder %s147, 0
      %s150 = sadd.s32 %s149, 1
      %s151 = scalar_select %p148, %s149, %s150
      %p154 = pneg %p148
      %p155 = scmp.eq.s32.totalorder %s24, 1
      %p156 = por %p154, %p155
      %p157 = scmp.ne.s32.totalorder %s149, %s152
      %p158 = scmp.eq.s32.totalorder %s24, 0
      %p159 = por %p157, %p158
      %p160 = scmp.ne.s32.totalorder %s149, %s152
      %p161 = scmp.eq.s32.totalorder %s29, 1
      %p162 = por %p160, %p161
      %p163 = scmp.ne.s32.totalorder %s152, %s153
      %p164 = scmp.eq.s32.totalorder %s29, 0
      %p165 = por %p163, %p164
      %p166 = scmp.ne.s32.totalorder %s152, %s153
      %p167 = scmp.eq.s32.totalorder %s30, 1
      %p168 = por %p166, %p167
      %p170 = scmp.ne.s32.totalorder %s153, %s169
      %p171 = scmp.eq.s32.totalorder %s30, 0
      %p172 = por %p170, %p171
      %s174 = sadd.s32 %s173, 1
      %p177 = scmp.eq.s32.totalorder %s24, 1
      %p178 = scmp.ne.s32.totalorder %s173, %s175
      %p179 = scmp.eq.s32.totalorder %s24, 0
      %p180 = por %p178, %p179
      %p181 = scmp.ne.s32.totalorder %s173, %s175
      %p182 = scmp.eq.s32.totalorder %s29, 1
      %p183 = por %p181, %p182
      %p184 = scmp.ne.s32.totalorder %s175, %s176
      %p185 = scmp.eq.s32.totalorder %s29, 0
      %p186 = por %p184, %p185
      %p187 = scmp.ne.s32.totalorder %s175, %s176
      %p188 = scmp.eq.s32.totalorder %s30, 1
      %p189 = por %p187, %p188
      %p191 = scmp.ne.s32.totalorder %s176, %s190
      %p192 = scmp.eq.s32.totalorder %s30, 0
      %p193 = por %p191, %p192
      %s195 = sadd.s32 %s194, 1
      %p198 = scmp.eq.s32.totalorder %s24, 1
      %p199 = scmp.ne.s32.totalorder %s194, %s196
      %p200 = scmp.eq.s32.totalorder %s24, 0
      %p201 = por %p199, %p200
      %p202 = scmp.ne.s32.totalorder %s194, %s196
      %p203 = scmp.eq.s32.totalorder %s29, 1
      %p204 = por %p202, %p203
      %p205 = scmp.ne.s32.totalorder %s196, %s197
      %p206 = scmp.eq.s32.totalorder %s29, 0
      %p207 = por %p205, %p206
      %p208 = scmp.ne.s32.totalorder %s196, %s197
      %p209 = scmp.eq.s32.totalorder %s30, 1
      %p210 = por %p208, %p209
      %p212 = scmp.ne.s32.totalorder %s197, %s211
      %p213 = scmp.eq.s32.totalorder %s30, 0
      %p214 = por %p212, %p213
      %p215 = scmp.le.s32.totalorder 1, %s24
      %p216 = scmp.lt.s32.totalorder %s24, 3
      %p217 = pnand %p215, %p216
      %p218 = pneg %p217
      // Predicated region
      $region9: #{tpu_custom_call.1} parent=5 // pred_check
        _
      $region10: #{tpu_custom_call.1} parent=5 // pred_check_branch
        %220 = sbr.rel (%p217) target = $region12
      $region11: #{tpu_custom_call.1} parent=5 // pred_region
        %s221 = ssub.s32 %s24, 1
        // Predicated region
        $region13: #{tpu_custom_call.1} parent=11 // pred_check
          %p222 = pneg %p45
        $region14: #{tpu_custom_call.1} parent=11 // pred_check_branch
          %224 = sbr.rel (%p222) target = $region16
        $region15: #{tpu_custom_call.1} parent=11 // pred_region
          %s226 = ssub.s32 256, 256
          %227 = vsyncadd [#allocation6], %s226
          %s228 = sshll.u32 [#allocation5], 4
          %s229 = int_to_ptr.vmem [resolvable:$true] %s228
          %234 = dma.hbm_to_vmem [thread:$0]  %s0, 256, %s229, [#allocation6], 128, 128, 8
        $region16: #{tpu_custom_call.1} parent=11 // pred_fallthru
          _
        // Predicated region
        $region17: #{tpu_custom_call.1} parent=11 // pred_check
          %p235 = pneg %p66
        $region18: #{tpu_custom_call.1} parent=11 // pred_check_branch
          %237 = sbr.rel (%p235) target = $region20
        $region19: #{tpu_custom_call.1} parent=11 // pred_region
          %s239 = ssub.s32 4096, 4096
          %240 = vsyncadd [#allocation9], %s239
          %s241 = sshll.u32 [#allocation8], 4
          %s242 = int_to_ptr.vmem [resolvable:$true] %s241
          %247 = dma.hbm_to_vmem [thread:$0]  %s1, 4096, %s242, [#allocation9], 512, 512, 32
        $region20: #{tpu_custom_call.1} parent=11 // pred_fallthru
          _
        // Predicated region
        $region21: #{tpu_custom_call.1} parent=11 // pred_check
          %p248 = pneg %p87
        $region22: #{tpu_custom_call.1} parent=11 // pred_check_branch
          %250 = sbr.rel (%p248) target = $region24
        $region23: #{tpu_custom_call.1} parent=11 // pred_region
          %s252 = ssub.s32 128, 128
          %253 = vsyncadd [#allocation9], %s252
          %s255 = sshll.u32 [#allocation10], 4
          %s256 = int_to_ptr.vmem [resolvable:$true] %s255
          %258 = dma.hbm_to_vmem [thread:$0]  %s2, 128, %s256, [#allocation9]
        $region24: #{tpu_custom_call.1} parent=11 // pred_fallthru
          _
        // Predicated region
        $region25: #{tpu_custom_call.1} parent=11 // pred_check
          %p259 = pneg %p186
        $region26: #{tpu_custom_call.1} parent=11 // pred_check_branch
          %261 = sbr.rel (%p259) target = $region28
        $region27: #{tpu_custom_call.1} parent=11 // pred_region
          _
        $region28: #{tpu_custom_call.1} parent=11 // pred_fallthru
          _
      $region12: #{tpu_custom_call.1} parent=5 // pred_fallthru
        _
      %p262 = scmp.lt.s32.totalorder %s24, 2
      // Predicated region
      $region29: #{tpu_custom_call.1} parent=5 // pred_check
        %p263 = pneg %p262
      $region30: #{tpu_custom_call.1} parent=5 // pred_check_branch
        %265 = sbr.rel (%p263) target = $region32
      $region31: #{tpu_custom_call.1} parent=5 // pred_region
        // Predicated region
        $region33: #{tpu_custom_call.1} parent=31 // pred_check
          %p266 = pneg %p107
        $region34: #{tpu_custom_call.1} parent=31 // pred_check_branch
          %268 = sbr.rel (%p266) target = $region36
        $region35: #{tpu_custom_call.1} parent=31 // pred_region
          %s269 = sand.u32 %s24, 1
          %s270 = scalar_lea.sflag [#allocation12], %s269
          %s271 = sand.u32 %s97, 1
          %s272 = smul.addr %s271, 2048
          %s273 = scalar_lea.vmem [#allocation11], %s272
          %s274 = smul.u32 4, %s24
          %s276 = ssub.s32 32768, 32768
          %277 = vsyncadd %s270, %s276
          %s278 = smul.addr %s274, 64
          %s279 = scalar_lea.hbm %s3, %s278
          %s280 = sshll.u32 %s273, 4
          %s281 = int_to_ptr.vmem [resolvable:$true] %s280
          %286 = dma.hbm_to_vmem [thread:$0]  %s279, 32768, %s281, %s270, 512, 256, 16
        $region36: #{tpu_custom_call.1} parent=31 // pred_fallthru
          _
        // Predicated region
        $region37: #{tpu_custom_call.1} parent=31 // pred_check
          %p287 = pneg %p133
        $region38: #{tpu_custom_call.1} parent=31 // pred_check_branch
          %289 = sbr.rel (%p287) target = $region40
        $region39: #{tpu_custom_call.1} parent=31 // pred_region
          %s290 = sand.u32 %s24, 1
          %s291 = scalar_lea.sflag [#allocation12], %s290
          %s292 = sand.u32 %s123, 1
          %s293 = smul.addr %s292, 4
          %s294 = scalar_lea.vmem [#allocation13], %s293
          %s295 = smul.u32 4, %s24
          %s297 = ssub.s32 64, 64
          %298 = vsyncadd %s291, %s297
          %s299 = smul.addr %s295, 16
          %s300 = scalar_lea.hbm %s4, %s299
          %s302 = sshll.u32 %s294, 4
          %s303 = int_to_ptr.vmem [resolvable:$true] %s302
          %305 = dma.hbm_to_vmem [thread:$0]  %s300, 64, %s303, %s291
        $region40: #{tpu_custom_call.1} parent=31 // pred_fallthru
          _
        // Predicated region
        $region41: #{tpu_custom_call.1} parent=31 // pred_check
          %p306 = pneg %p159
        $region42: #{tpu_custom_call.1} parent=31 // pred_check_branch
          %308 = sbr.rel (%p306) target = $region44
        $region43: #{tpu_custom_call.1} parent=31 // pred_region
          %s309 = sand.u32 %s149, 1
          %s310 = scalar_lea.sflag [#allocation15], %s309
          %s311 = sand.u32 %s149, 1
          %s312 = smul.addr %s311, 4
          %s313 = scalar_lea.vmem [#allocation14], %s312
          %s314 = smul.u32 4, %s24
          %s316 = ssub.s32 64, 64
          %317 = vsyncadd %s310, %s316
          %s318 = smul.addr %s314, 16
          %s319 = scalar_lea.hbm %s5, %s318
          %s321 = sshll.u32 %s313, 4
          %s322 = int_to_ptr.vmem [resolvable:$true] %s321
          %324 = dma.hbm_to_vmem [thread:$0]  %s319, 64, %s322, %s310
        $region44: #{tpu_custom_call.1} parent=31 // pred_fallthru
          _
      $region32: #{tpu_custom_call.1} parent=5 // pred_fallthru
        _
      %p325 = scmp.le.s32.totalorder 1, %s24
      %p326 = scmp.lt.s32.totalorder %s24, 3
      %p327 = pnand %p325, %p326
      %p328 = pneg %p327
      // Predicated region
      $region45: #{tpu_custom_call.1} parent=5 // pred_check
        _
      $region46: #{tpu_custom_call.1} parent=5 // pred_check_branch
        %330 = sbr.rel (%p327) target = $region48
      $region47: #{tpu_custom_call.1} parent=5 // pred_region
        %s331 = ssub.s32 %s24, 1
        // Predicated region
        $region49: #{tpu_custom_call.1} parent=47 // pred_check
          %p332 = pneg %p45
        $region50: #{tpu_custom_call.1} parent=47 // pred_check_branch
          %334 = sbr.rel (%p332) target = $region52
        $region51: #{tpu_custom_call.1} parent=47 // pred_region
          %335 = dma.done [#allocation6], 256
        $region52: #{tpu_custom_call.1} parent=47 // pred_fallthru
          _
        // Predicated region
        $region53: #{tpu_custom_call.1} parent=47 // pred_check
          %p336 = pneg %p66
        $region54: #{tpu_custom_call.1} parent=47 // pred_check_branch
          %338 = sbr.rel (%p336) target = $region56
        $region55: #{tpu_custom_call.1} parent=47 // pred_region
          %339 = dma.done [#allocation9], 4096
        $region56: #{tpu_custom_call.1} parent=47 // pred_fallthru
          _
        // Predicated region
        $region57: #{tpu_custom_call.1} parent=47 // pred_check
          %p340 = pneg %p87
        $region58: #{tpu_custom_call.1} parent=47 // pred_check_branch
          %342 = sbr.rel (%p340) target = $region60
        $region59: #{tpu_custom_call.1} parent=47 // pred_region
          %343 = dma.done [#allocation9], 128
        $region60: #{tpu_custom_call.1} parent=47 // pred_fallthru
          _
        %s344 = sand.u32 %s29, 1
        %s345 = scalar_lea.sflag [#allocation12], %s344
        %s346 = sand.u32 %s100, 1
        %s347 = smul.addr %s346, 2048
        %s348 = scalar_lea.vmem [#allocation11], %s347
        // Predicated region
        $region61: #{tpu_custom_call.1} parent=47 // pred_check
          %p349 = pneg %p113
        $region62: #{tpu_custom_call.1} parent=47 // pred_check_branch
          %351 = sbr.rel (%p349) target = $region64
        $region63: #{tpu_custom_call.1} parent=47 // pred_region
          %352 = dma.done %s345, 32768
        $region64: #{tpu_custom_call.1} parent=47 // pred_fallthru
          _
        %s353 = sand.u32 %s29, 1
        %s354 = scalar_lea.sflag [#allocation12], %s353
        %s355 = sand.u32 %s126, 1
        %s356 = smul.addr %s355, 4
        %s357 = scalar_lea.vmem [#allocation13], %s356
        // Predicated region
        $region65: #{tpu_custom_call.1} parent=47 // pred_check
          %p358 = pneg %p139
        $region66: #{tpu_custom_call.1} parent=47 // pred_check_branch
          %360 = sbr.rel (%p358) target = $region68
        $region67: #{tpu_custom_call.1} parent=47 // pred_region
          %361 = dma.done %s354, 64
        $region68: #{tpu_custom_call.1} parent=47 // pred_fallthru
          _
        %s362 = sand.u32 %s152, 1
        %s363 = scalar_lea.sflag [#allocation15], %s362
        %s364 = sand.u32 %s152, 1
        %s365 = smul.addr %s364, 4
        %s366 = scalar_lea.vmem [#allocation14], %s365
        // Predicated region
        $region69: #{tpu_custom_call.1} parent=47 // pred_check
          %p367 = pneg %p165
        $region70: #{tpu_custom_call.1} parent=47 // pred_check_branch
          %369 = sbr.rel (%p367) target = $region72
        $region71: #{tpu_custom_call.1} parent=47 // pred_region
          %370 = dma.done %s363, 64
        $region72: #{tpu_custom_call.1} parent=47 // pred_fallthru
          _
        %p371 = pneg %p45
        %p372 = pneg %p42
        %p373 = pneg %p66
        %p374 = pneg %p63
        %p375 = pneg %p87
        %p376 = pneg %p84
        %s377 = sand.u32 %s29, 1
        %s378 = scalar_lea.sflag [#allocation12], %s377
        %s379 = sand.u32 %s100, 1
        %s380 = smul.addr %s379, 2048
        %s381 = scalar_lea.vmem [#allocation11], %s380
        %p382 = pneg %p113
        %p383 = pneg %p110
        %s384 = sand.u32 %s29, 1
        %s385 = scalar_lea.sflag [#allocation12], %s384
        %s386 = sand.u32 %s126, 1
        %s387 = smul.addr %s386, 4
        %s388 = scalar_lea.vmem [#allocation13], %s387
        %p389 = pneg %p139
        %p390 = pneg %p136
        %s391 = sand.u32 %s152, 1
        %s392 = scalar_lea.sflag [#allocation15], %s391
        %s393 = sand.u32 %s152, 1
        %s394 = smul.addr %s393, 4
        %s395 = scalar_lea.vmem [#allocation14], %s394
        %p396 = pneg %p165
        %p397 = pneg %p162
        %p398 = pneg %p186
        %p399 = pneg %p183
        %p400 = pneg %p207
        %p401 = pneg %p204
        %s402 = smul.u32 4, %s29
        %s403 = smul.u32 4, %s29
        %s404 = smul.u32 4, %s29
        %p406 = scmp.eq.s32.totalorder %s29, 0
        // Predicated region
        $region73: #{tpu_custom_call.1} parent=47 // pred_check
          %p407 = pneg %p406
        $region74: #{tpu_custom_call.1} parent=47 // pred_check_branch
          %409 = sbr.rel (%p407) target = $region76
        $region75: #{tpu_custom_call.1} parent=47 // pred_region
          %v410 = vld [vmem:[#allocation5] sm:$0xff]
          %v411 = vld [vmem:[#allocation5 + $0x8] sm:$0xff]
          %v412 = vpack.c.bf16 %v411, %v410
          %v413 = vld [vmem:[#allocation8] sm:$0xff]
          %v414 = vld [vmem:[#allocation8 + $0x8] sm:$0xff]
          %v415 = vld [vmem:[#allocation8 + $0x10] sm:$0xff]
          %v416 = vld [vmem:[#allocation8 + $0x18] sm:$0xff]
          %v417 = vld [vmem:[#allocation8 + $0x20] sm:$0xff]
          %v418 = vld [vmem:[#allocation8 + $0x28] sm:$0xff]
          %v419 = vld [vmem:[#allocation8 + $0x30] sm:$0xff]
          %v420 = vld [vmem:[#allocation8 + $0x38] sm:$0xff]
          %v421 = vld [vmem:[#allocation8 + $0x40] sm:$0xff]
          %v422 = vld [vmem:[#allocation8 + $0x48] sm:$0xff]
          %v423 = vld [vmem:[#allocation8 + $0x50] sm:$0xff]
          %v424 = vld [vmem:[#allocation8 + $0x58] sm:$0xff]
          %v425 = vld [vmem:[#allocation8 + $0x60] sm:$0xff]
          %v426 = vld [vmem:[#allocation8 + $0x68] sm:$0xff]
          %v427 = vld [vmem:[#allocation8 + $0x70] sm:$0xff]
          %v428 = vld [vmem:[#allocation8 + $0x78] sm:$0xff]
          %v429 = vld [vmem:[#allocation8 + $0x80] sm:$0xff]
          %v430 = vld [vmem:[#allocation8 + $0x88] sm:$0xff]
          %v431 = vld [vmem:[#allocation8 + $0x90] sm:$0xff]
          %v432 = vld [vmem:[#allocation8 + $0x98] sm:$0xff]
          %v433 = vld [vmem:[#allocation8 + $0xa0] sm:$0xff]
          %v434 = vld [vmem:[#allocation8 + $0xa8] sm:$0xff]
          %v435 = vld [vmem:[#allocation8 + $0xb0] sm:$0xff]
          %v436 = vld [vmem:[#allocation8 + $0xb8] sm:$0xff]
          %v437 = vld [vmem:[#allocation8 + $0xc0] sm:$0xff]
          %v438 = vld [vmem:[#allocation8 + $0xc8] sm:$0xff]
          %v439 = vld [vmem:[#allocation8 + $0xd0] sm:$0xff]
          %v440 = vld [vmem:[#allocation8 + $0xd8] sm:$0xff]
          %v441 = vld [vmem:[#allocation8 + $0xe0] sm:$0xff]
          %v442 = vld [vmem:[#allocation8 + $0xe8] sm:$0xff]
          %v443 = vld [vmem:[#allocation8 + $0xf0] sm:$0xff]
          %v444 = vld [vmem:[#allocation8 + $0xf8] sm:$0xff]
          %v445 = vld [vmem:[#allocation10] sm:$0xff]
          %v447 = vlaneseq
          %v448 = vshrl.u32 %v447, 7
          %v449 = vsub.s32 0, %v448
          %v450 = vrot.slane %v445, %v449
          %v451 = vlaneseq
          %v452 = vshrl.u32 %v451, 7
          %v453 = vsub.s32 1, %v452
          %v454 = vrot.slane %v445, %v453
          %v455 = vlaneseq
          %v456 = vshrl.u32 %v455, 7
          %v457 = vsub.s32 2, %v456
          %v458 = vrot.slane %v445, %v457
          %v459 = vlaneseq
          %v460 = vshrl.u32 %v459, 7
          %v461 = vsub.s32 3, %v460
          %v462 = vrot.slane %v445, %v461
          %v463 = vlaneseq
          %v464 = vshrl.u32 %v463, 7
          %v465 = vsub.s32 4, %v464
          %v466 = vrot.slane %v445, %v465
          %v467 = vlaneseq
          %v468 = vshrl.u32 %v467, 7
          %v469 = vsub.s32 5, %v468
          %v470 = vrot.slane %v445, %v469
          %v471 = vlaneseq
          %v472 = vshrl.u32 %v471, 7
          %v473 = vsub.s32 6, %v472
          %v474 = vrot.slane %v445, %v473
          %v475 = vlaneseq
          %v476 = vshrl.u32 %v475, 7
          %v477 = vsub.s32 7, %v476
          %v478 = vrot.slane %v445, %v477
          %v519 = vunpack.c.l.b16 %v413
          %v520 = vunpack.c.h.b16 %v413
          %v521 = vunpack.c.l.b16 %v414
          %v522 = vunpack.c.h.b16 %v414
          %v523 = vunpack.c.l.b16 %v415
          %v524 = vunpack.c.h.b16 %v415
          %v525 = vunpack.c.l.b16 %v416
          %v526 = vunpack.c.h.b16 %v416
          %v527 = vunpack.c.l.b16 %v417
          %v528 = vunpack.c.h.b16 %v417
          %v529 = vunpack.c.l.b16 %v418
          %v530 = vunpack.c.h.b16 %v418
          %v531 = vunpack.c.l.b16 %v419
          %v532 = vunpack.c.h.b16 %v419
          %v533 = vunpack.c.l.b16 %v420
          %v534 = vunpack.c.h.b16 %v420
          %v535 = vunpack.c.l.b16 %v421
          %v536 = vunpack.c.h.b16 %v421
          %v537 = vunpack.c.l.b16 %v422
          %v538 = vunpack.c.h.b16 %v422
          %v539 = vunpack.c.l.b16 %v423
          %v540 = vunpack.c.h.b16 %v423
          %v541 = vunpack.c.l.b16 %v424
          %v542 = vunpack.c.h.b16 %v424
          %v543 = vunpack.c.l.b16 %v425
          %v544 = vunpack.c.h.b16 %v425
          %v545 = vunpack.c.l.b16 %v426
          %v546 = vunpack.c.h.b16 %v426
          %v547 = vunpack.c.l.b16 %v427
          %v548 = vunpack.c.h.b16 %v427
          %v549 = vunpack.c.l.b16 %v428
          %v550 = vunpack.c.h.b16 %v428
          %v551 = vunpack.c.l.b16 %v429
          %v552 = vunpack.c.h.b16 %v429
          %v553 = vunpack.c.l.b16 %v430
          %v554 = vunpack.c.h.b16 %v430
          %v555 = vunpack.c.l.b16 %v431
          %v556 = vunpack.c.h.b16 %v431
          %v557 = vunpack.c.l.b16 %v432
          %v558 = vunpack.c.h.b16 %v432
          %v559 = vunpack.c.l.b16 %v433
          %v560 = vunpack.c.h.b16 %v433
          %v561 = vunpack.c.l.b16 %v434
          %v562 = vunpack.c.h.b16 %v434
          %v563 = vunpack.c.l.b16 %v435
          %v564 = vunpack.c.h.b16 %v435
          %v565 = vunpack.c.l.b16 %v436
          %v566 = vunpack.c.h.b16 %v436
          %v567 = vunpack.c.l.b16 %v437
          %v568 = vunpack.c.h.b16 %v437
          %v569 = vunpack.c.l.b16 %v438
          %v570 = vunpack.c.h.b16 %v438
          %v571 = vunpack.c.l.b16 %v439
          %v572 = vunpack.c.h.b16 %v439
          %v573 = vunpack.c.l.b16 %v440
          %v574 = vunpack.c.h.b16 %v440
          %v575 = vunpack.c.l.b16 %v441
          %v576 = vunpack.c.h.b16 %v441
          %v577 = vunpack.c.l.b16 %v442
          %v578 = vunpack.c.h.b16 %v442
          %v579 = vunpack.c.l.b16 %v443
          %v580 = vunpack.c.h.b16 %v443
          %v581 = vunpack.c.l.b16 %v444
          %v582 = vunpack.c.h.b16 %v444
          %v583 = vpack.c.b16 %v527, %v519
          %v584 = vpack.c.b16 %v528, %v520
          %v585 = vpack.c.b16 %v529, %v521
          %v586 = vpack.c.b16 %v530, %v522
          %v587 = vpack.c.b16 %v531, %v523
          %v588 = vpack.c.b16 %v532, %v524
          %v589 = vpack.c.b16 %v533, %v525
          %v590 = vpack.c.b16 %v534, %v526
          %v591 = vpack.c.b16 %v543, %v535
          %v592 = vpack.c.b16 %v544, %v536
          %v593 = vpack.c.b16 %v545, %v537
          %v594 = vpack.c.b16 %v546, %v538
          %v595 = vpack.c.b16 %v547, %v539
          %v596 = vpack.c.b16 %v548, %v540
          %v597 = vpack.c.b16 %v549, %v541
          %v598 = vpack.c.b16 %v550, %v542
          %v599 = vpack.c.b16 %v559, %v551
          %v600 = vpack.c.b16 %v560, %v552
          %v601 = vpack.c.b16 %v561, %v553
          %v602 = vpack.c.b16 %v562, %v554
          %v603 = vpack.c.b16 %v563, %v555
          %v604 = vpack.c.b16 %v564, %v556
          %v605 = vpack.c.b16 %v565, %v557
          %v606 = vpack.c.b16 %v566, %v558
          %v607 = vpack.c.b16 %v575, %v567
          %v608 = vpack.c.b16 %v576, %v568
          %v609 = vpack.c.b16 %v577, %v569
          %v610 = vpack.c.b16 %v578, %v570
          %v611 = vpack.c.b16 %v579, %v571
          %v612 = vpack.c.b16 %v580, %v572
          %v613 = vpack.c.b16 %v581, %v573
          %v614 = vpack.c.b16 %v582, %v574
          %vm647 = vcmask 523264
          %v649 = vsel %vm647, %v412, 0
          %651 = vmatprep.subr.bf16.mxu0 %v584
          %652 = vmatpush1.bf16.msra.mxu0 %v583
          %653 = vmatprep.subr.bf16.mxu0 %v592
          %654 = vmatpush1.bf16.msra.mxu0 %v591
          %655 = vmatprep.subr.bf16.mxu0 %v600
          %656 = vmatpush1.bf16.msra.mxu0 %v599
          %657 = vmatprep.subr.bf16.mxu0 %v608
          %658 = vmatpush1.bf16.msra.mxu0 %v607
          %659 = vmatprep.subr.bf16.mxu0 0
          %660 = vmatpush1.bf16.msra.mxu0 0
          %661 = vmatprep.subr.bf16.mxu0 0
          %662 = vmatpush1.bf16.msra.mxu0 0
          %663 = vmatprep.subr.bf16.mxu0 0
          %664 = vmatpush1.bf16.msra.mxu0 0
          %665 = vmatprep.subr.bf16.mxu0 0
          %666 = vmatpush1.bf16.msra.mxu0 0
          %667 = vmatprep.subr.bf16.mxu0 0
          %668 = vmatpush1.bf16.msra.mxu0 0
          %669 = vmatprep.subr.bf16.mxu0 0
          %670 = vmatpush1.bf16.msra.mxu0 0
          %671 = vmatprep.subr.bf16.mxu0 0
          %672 = vmatpush1.bf16.msra.mxu0 0
          %673 = vmatprep.subr.bf16.mxu0 0
          %674 = vmatpush1.bf16.msra.mxu0 0
          %675 = vmatprep.subr.bf16.mxu0 0
          %676 = vmatpush1.bf16.msra.mxu0 0
          %677 = vmatprep.subr.bf16.mxu0 0
          %678 = vmatpush1.bf16.msra.mxu0 0
          %679 = vmatprep.subr.bf16.mxu0 0
          %680 = vmatpush1.bf16.msra.mxu0 0
          %681 = vmatprep.subr.bf16.mxu0 0
          %682 = vmatpush1.bf16.msra.mxu0 0
          %683 = vmatprep.mubr.bf16.mxu0 0
          %684 = vmatmul.mubr.bf16.gmra.mrb[0].mxu0 %v649
          %v685 = vpop.f32.mrb[0].mxu0
          %v686 = vadd.f32 %v450, %v685
          %v687 = vpop.f32.mrb[0].mxu0
          %v688 = vadd.f32 %v454, %v687
          %v689 = vpop.f32.mrb[0].mxu0
          %v690 = vadd.f32 %v450, %v689
          %v691 = vpop.f32.mrb[0].mxu0
          %v692 = vadd.f32 %v454, %v691
          %693 = vdwg.mxu0
          %694 = vmatprep.subr.bf16.mxu0 %v586
          %695 = vmatpush1.bf16.msra.mxu0 %v585
          %696 = vmatprep.subr.bf16.mxu0 %v594
          %697 = vmatpush1.bf16.msra.mxu0 %v593
          %698 = vmatprep.subr.bf16.mxu0 %v602
          %699 = vmatpush1.bf16.msra.mxu0 %v601
          %700 = vmatprep.subr.bf16.mxu0 %v610
          %701 = vmatpush1.bf16.msra.mxu0 %v609
          %702 = vmatprep.subr.bf16.mxu0 0
          %703 = vmatpush1.bf16.msra.mxu0 0
          %704 = vmatprep.subr.bf16.mxu0 0
          %705 = vmatpush1.bf16.msra.mxu0 0
          %706 = vmatprep.subr.bf16.mxu0 0
          %707 = vmatpush1.bf16.msra.mxu0 0
          %708 = vmatprep.subr.bf16.mxu0 0
          %709 = vmatpush1.bf16.msra.mxu0 0
          %710 = vmatprep.subr.bf16.mxu0 0
          %711 = vmatpush1.bf16.msra.mxu0 0
          %712 = vmatprep.subr.bf16.mxu0 0
          %713 = vmatpush1.bf16.msra.mxu0 0
          %714 = vmatprep.subr.bf16.mxu0 0
          %715 = vmatpush1.bf16.msra.mxu0 0
          %716 = vmatprep.subr.bf16.mxu0 0
          %717 = vmatpush1.bf16.msra.mxu0 0
          %718 = vmatprep.subr.bf16.mxu0 0
          %719 = vmatpush1.bf16.msra.mxu0 0
          %720 = vmatprep.subr.bf16.mxu0 0
          %721 = vmatpush1.bf16.msra.mxu0 0
          %722 = vmatprep.subr.bf16.mxu0 0
          %723 = vmatpush1.bf16.msra.mxu0 0
          %724 = vmatprep.subr.bf16.mxu0 0
          %725 = vmatpush1.bf16.msra.mxu0 0
          %726 = vmatprep.mubr.bf16.mxu0 0
          %727 = vmatmul.mubr.bf16.gmra.mrb[0].mxu0 %v649
          %v728 = vpop.f32.mrb[0].mxu0
          %v729 = vadd.f32 %v458, %v728
          %v730 = vpop.f32.mrb[0].mxu0
          %v731 = vadd.f32 %v462, %v730
          %v732 = vpop.f32.mrb[0].mxu0
          %v733 = vadd.f32 %v458, %v732
          %v734 = vpop.f32.mrb[0].mxu0
          %v735 = vadd.f32 %v462, %v734
          %736 = vdwg.mxu0
          %737 = vmatprep.subr.bf16.mxu0 %v588
          %738 = vmatpush1.bf16.msra.mxu0 %v587
          %739 = vmatprep.subr.bf16.mxu0 %v596
          %740 = vmatpush1.bf16.msra.mxu0 %v595
          %741 = vmatprep.subr.bf16.mxu0 %v604
          %742 = vmatpush1.bf16.msra.mxu0 %v603
          %743 = vmatprep.subr.bf16.mxu0 %v612
          %744 = vmatpush1.bf16.msra.mxu0 %v611
          %745 = vmatprep.subr.bf16.mxu0 0
          %746 = vmatpush1.bf16.msra.mxu0 0
          %747 = vmatprep.subr.bf16.mxu0 0
          %748 = vmatpush1.bf16.msra.mxu0 0
          %749 = vmatprep.subr.bf16.mxu0 0
          %750 = vmatpush1.bf16.msra.mxu0 0
          %751 = vmatprep.subr.bf16.mxu0 0
          %752 = vmatpush1.bf16.msra.mxu0 0
          %753 = vmatprep.subr.bf16.mxu0 0
          %754 = vmatpush1.bf16.msra.mxu0 0
          %755 = vmatprep.subr.bf16.mxu0 0
          %756 = vmatpush1.bf16.msra.mxu0 0
          %757 = vmatprep.subr.bf16.mxu0 0
          %758 = vmatpush1.bf16.msra.mxu0 0
          %759 = vmatprep.subr.bf16.mxu0 0
          %760 = vmatpush1.bf16.msra.mxu0 0
          %761 = vmatprep.subr.bf16.mxu0 0
          %762 = vmatpush1.bf16.msra.mxu0 0
          %763 = vmatprep.subr.bf16.mxu0 0
          %764 = vmatpush1.bf16.msra.mxu0 0
          %765 = vmatprep.subr.bf16.mxu0 0
          %766 = vmatpush1.bf16.msra.mxu0 0
          %767 = vmatprep.subr.bf16.mxu0 0
          %768 = vmatpush1.bf16.msra.mxu0 0
          %769 = vmatprep.mubr.bf16.mxu0 0
          %770 = vmatmul.mubr.bf16.gmra.mrb[0].mxu0 %v649
          %v771 = vpop.f32.mrb[0].mxu0
          %v772 = vadd.f32 %v466, %v771
          %v773 = vpop.f32.mrb[0].mxu0
          %v774 = vadd.f32 %v470, %v773
          %v775 = vpop.f32.mrb[0].mxu0
          %v776 = vadd.f32 %v466, %v775
          %v777 = vpop.f32.mrb[0].mxu0
          %v778 = vadd.f32 %v470, %v777
          %779 = vdwg.mxu0
          %780 = vmatprep.subr.bf16.mxu0 %v590
          %781 = vmatpush1.bf16.msra.mxu0 %v589
          %782 = vmatprep.subr.bf16.mxu0 %v598
          %783 = vmatpush1.bf16.msra.mxu0 %v597
          %784 = vmatprep.subr.bf16.mxu0 %v606
          %785 = vmatpush1.bf16.msra.mxu0 %v605
          %786 = vmatprep.subr.bf16.mxu0 %v614
          %787 = vmatpush1.bf16.msra.mxu0 %v613
          %788 = vmatprep.subr.bf16.mxu0 0
          %789 = vmatpush1.bf16.msra.mxu0 0
          %790 = vmatprep.subr.bf16.mxu0 0
          %791 = vmatpush1.bf16.msra.mxu0 0
          %792 = vmatprep.subr.bf16.mxu0 0
          %793 = vmatpush1.bf16.msra.mxu0 0
          %794 = vmatprep.subr.bf16.mxu0 0
          %795 = vmatpush1.bf16.msra.mxu0 0
          %796 = vmatprep.subr.bf16.mxu0 0
          %797 = vmatpush1.bf16.msra.mxu0 0
          %798 = vmatprep.subr.bf16.mxu0 0
          %799 = vmatpush1.bf16.msra.mxu0 0
          %800 = vmatprep.subr.bf16.mxu0 0
          %801 = vmatpush1.bf16.msra.mxu0 0
          %802 = vmatprep.subr.bf16.mxu0 0
          %803 = vmatpush1.bf16.msra.mxu0 0
          %804 = vmatprep.subr.bf16.mxu0 0
          %805 = vmatpush1.bf16.msra.mxu0 0
          %806 = vmatprep.subr.bf16.mxu0 0
          %807 = vmatpush1.bf16.msra.mxu0 0
          %808 = vmatprep.subr.bf16.mxu0 0
          %809 = vmatpush1.bf16.msra.mxu0 0
          %810 = vmatprep.subr.bf16.mxu0 0
          %811 = vmatpush1.bf16.msra.mxu0 0
          %812 = vmatprep.mubr.bf16.mxu0 0
          %813 = vmatmul.mubr.bf16.gmra.mrb[0].mxu0 %v649
          %v814 = vpop.f32.mrb[0].mxu0
          %v815 = vadd.f32 %v474, %v814
          %v816 = vpop.f32.mrb[0].mxu0
          %v817 = vadd.f32 %v478, %v816
          %v818 = vpop.f32.mrb[0].mxu0
          %v819 = vadd.f32 %v474, %v818
          %v820 = vpop.f32.mrb[0].mxu0
          %v821 = vadd.f32 %v478, %v820
          %822 = vdwg.mxu0
          %v823 = vmax.f32 %v686, 0.0
          %v824 = vmax.f32 %v688, 0.0
          %v825 = vmax.f32 %v729, 0.0
          %v826 = vmax.f32 %v731, 0.0
          %v827 = vmax.f32 %v772, 0.0
          %v828 = vmax.f32 %v774, 0.0
          %v829 = vmax.f32 %v815, 0.0
          %v830 = vmax.f32 %v817, 0.0
          %v831 = vmax.f32 %v690, 0.0
          %v832 = vmax.f32 %v692, 0.0
          %v833 = vmax.f32 %v733, 0.0
          %v834 = vmax.f32 %v735, 0.0
          %v835 = vmax.f32 %v776, 0.0
          %v836 = vmax.f32 %v778, 0.0
          %v837 = vmax.f32 %v819, 0.0
          %v838 = vmax.f32 %v821, 0.0
          %839 = vst [vmem:[#allocation2] sm:$0xff] %v823
          %840 = vst [vmem:[#allocation2 + $0x8] sm:$0xff] %v824
          %841 = vst [vmem:[#allocation2 + $0x10] sm:$0xff] %v825
          %842 = vst [vmem:[#allocation2 + $0x18] sm:$0xff] %v826
          %843 = vst [vmem:[#allocation2 + $0x20] sm:$0xff] %v827
          %844 = vst [vmem:[#allocation2 + $0x28] sm:$0xff] %v828
          %845 = vst [vmem:[#allocation2 + $0x30] sm:$0xff] %v829
          %846 = vst [vmem:[#allocation2 + $0x38] sm:$0xff] %v830
          %847 = vst [vmem:[#allocation2 + $0x40] sm:$0xff] %v831
          %848 = vst [vmem:[#allocation2 + $0x48] sm:$0xff] %v832
          %849 = vst [vmem:[#allocation2 + $0x50] sm:$0xff] %v833
          %850 = vst [vmem:[#allocation2 + $0x58] sm:$0xff] %v834
          %851 = vst [vmem:[#allocation2 + $0x60] sm:$0xff] %v835
          %852 = vst [vmem:[#allocation2 + $0x68] sm:$0xff] %v836
          %853 = vst [vmem:[#allocation2 + $0x70] sm:$0xff] %v837
          %854 = vst [vmem:[#allocation2 + $0x78] sm:$0xff] %v838
          %vm855 = vcmask 7168
          %856 = vst.msk [vmem:[#allocation3] sm:$0xff] %vm855, 0.0
          %857 = vst.msk [vmem:[#allocation3 + $0x8] sm:$0xff] %vm855, 0.0
        $region76: #{tpu_custom_call.1} parent=47 // pred_fallthru
          _
        %v858 = vld [vmem:[#allocation2] sm:$0xff]
        %v859 = vld [vmem:[#allocation2 + $0x8] sm:$0xff]
        %v860 = vld [vmem:[#allocation2 + $0x10] sm:$0xff]
        %v861 = vld [vmem:[#allocation2 + $0x18] sm:$0xff]
        %v862 = vld [vmem:[#allocation2 + $0x20] sm:$0xff]
        %v863 = vld [vmem:[#allocation2 + $0x28] sm:$0xff]
        %v864 = vld [vmem:[#allocation2 + $0x30] sm:$0xff]
        %v865 = vld [vmem:[#allocation2 + $0x38] sm:$0xff]
        %v866 = vld [vmem:[#allocation2 + $0x40] sm:$0xff]
        %v867 = vld [vmem:[#allocation2 + $0x48] sm:$0xff]
        %v868 = vld [vmem:[#allocation2 + $0x50] sm:$0xff]
        %v869 = vld [vmem:[#allocation2 + $0x58] sm:$0xff]
        %v870 = vld [vmem:[#allocation2 + $0x60] sm:$0xff]
        %v871 = vld [vmem:[#allocation2 + $0x68] sm:$0xff]
        %v872 = vld [vmem:[#allocation2 + $0x70] sm:$0xff]
        %v873 = vld [vmem:[#allocation2 + $0x78] sm:$0xff]
        %v874 = vpack.c.bf16 %v866, %v858
        %v875 = vpack.c.bf16 %v867, %v859
        %v876 = vpack.c.bf16 %v868, %v860
        %v877 = vpack.c.bf16 %v869, %v861
        %v878 = vpack.c.bf16 %v870, %v862
        %v879 = vpack.c.bf16 %v871, %v863
        %v880 = vpack.c.bf16 %v872, %v864
        %v881 = vpack.c.bf16 %v873, %v865
        %v882 = vld [vmem:[%s348] sm:$0xff]
        %v883 = vld [vmem:[%s348 + $0x8] sm:$0xff]
        %v884 = vld [vmem:[%s348 + $0x10] sm:$0xff]
        %v885 = vld [vmem:[%s348 + $0x18] sm:$0xff]
        %v886 = vld [vmem:[%s348 + $0x20] sm:$0xff]
        %v887 = vld [vmem:[%s348 + $0x28] sm:$0xff]
        %v888 = vld [vmem:[%s348 + $0x30] sm:$0xff]
        %v889 = vld [vmem:[%s348 + $0x38] sm:$0xff]
        %v890 = vld [vmem:[%s348 + $0x40] sm:$0xff]
        %v891 = vld [vmem:[%s348 + $0x48] sm:$0xff]
        %v892 = vld [vmem:[%s348 + $0x50] sm:$0xff]
        %v893 = vld [vmem:[%s348 + $0x58] sm:$0xff]
        %v894 = vld [vmem:[%s348 + $0x60] sm:$0xff]
        %v895 = vld [vmem:[%s348 + $0x68] sm:$0xff]
        %v896 = vld [vmem:[%s348 + $0x70] sm:$0xff]
        %v897 = vld [vmem:[%s348 + $0x78] sm:$0xff]
        %v898 = vld [vmem:[%s348 + $0x80] sm:$0xff]
        %v899 = vld [vmem:[%s348 + $0x88] sm:$0xff]
        %v900 = vld [vmem:[%s348 + $0x90] sm:$0xff]
        %v901 = vld [vmem:[%s348 + $0x98] sm:$0xff]
        %v902 = vld [vmem:[%s348 + $0xa0] sm:$0xff]
        %v903 = vld [vmem:[%s348 + $0xa8] sm:$0xff]
        %v904 = vld [vmem:[%s348 + $0xb0] sm:$0xff]
        %v905 = vld [vmem:[%s348 + $0xb8] sm:$0xff]
        %v906 = vld [vmem:[%s348 + $0xc0] sm:$0xff]
        %v907 = vld [vmem:[%s348 + $0xc8] sm:$0xff]
        %v908 = vld [vmem:[%s348 + $0xd0] sm:$0xff]
        %v909 = vld [vmem:[%s348 + $0xd8] sm:$0xff]
        %v910 = vld [vmem:[%s348 + $0xe0] sm:$0xff]
        %v911 = vld [vmem:[%s348 + $0xe8] sm:$0xff]
        %v912 = vld [vmem:[%s348 + $0xf0] sm:$0xff]
        %v913 = vld [vmem:[%s348 + $0xf8] sm:$0xff]
        %v914 = vld [vmem:[%s348 + $0x100] sm:$0xff]
        %v915 = vld [vmem:[%s348 + $0x108] sm:$0xff]
        %v916 = vld [vmem:[%s348 + $0x110] sm:$0xff]
        %v917 = vld [vmem:[%s348 + $0x118] sm:$0xff]
        %v918 = vld [vmem:[%s348 + $0x120] sm:$0xff]
        %v919 = vld [vmem:[%s348 + $0x128] sm:$0xff]
        %v920 = vld [vmem:[%s348 + $0x130] sm:$0xff]
        %v921 = vld [vmem:[%s348 + $0x138] sm:$0xff]
        %v922 = vld [vmem:[%s348 + $0x140] sm:$0xff]
        %v923 = vld [vmem:[%s348 + $0x148] sm:$0xff]
        %v924 = vld [vmem:[%s348 + $0x150] sm:$0xff]
        %v925 = vld [vmem:[%s348 + $0x158] sm:$0xff]
        %v926 = vld [vmem:[%s348 + $0x160] sm:$0xff]
        %v927 = vld [vmem:[%s348 + $0x168] sm:$0xff]
        %v928 = vld [vmem:[%s348 + $0x170] sm:$0xff]
        %v929 = vld [vmem:[%s348 + $0x178] sm:$0xff]
        %v930 = vld [vmem:[%s348 + $0x180] sm:$0xff]
        %v931 = vld [vmem:[%s348 + $0x188] sm:$0xff]
        %v932 = vld [vmem:[%s348 + $0x190] sm:$0xff]
        %v933 = vld [vmem:[%s348 + $0x198] sm:$0xff]
        %v934 = vld [vmem:[%s348 + $0x1a0] sm:$0xff]
        %v935 = vld [vmem:[%s348 + $0x1a8] sm:$0xff]
        %v936 = vld [vmem:[%s348 + $0x1b0] sm:$0xff]
        %v937 = vld [vmem:[%s348 + $0x1b8] sm:$0xff]
        %v938 = vld [vmem:[%s348 + $0x1c0] sm:$0xff]
        %v939 = vld [vmem:[%s348 + $0x1c8] sm:$0xff]
        %v940 = vld [vmem:[%s348 + $0x1d0] sm:$0xff]
        %v941 = vld [vmem:[%s348 + $0x1d8] sm:$0xff]
        %v942 = vld [vmem:[%s348 + $0x1e0] sm:$0xff]
        %v943 = vld [vmem:[%s348 + $0x1e8] sm:$0xff]
        %v944 = vld [vmem:[%s348 + $0x1f0] sm:$0xff]
        %v945 = vld [vmem:[%s348 + $0x1f8] sm:$0xff]
        %v946 = vld [vmem:[%s348 + $0x200] sm:$0xff]
        %v947 = vld [vmem:[%s348 + $0x208] sm:$0xff]
        %v948 = vld [vmem:[%s348 + $0x210] sm:$0xff]
        %v949 = vld [vmem:[%s348 + $0x218] sm:$0xff]
        %v950 = vld [vmem:[%s348 + $0x220] sm:$0xff]
        %v951 = vld [vmem:[%s348 + $0x228] sm:$0xff]
        %v952 = vld [vmem:[%s348 + $0x230] sm:$0xff]
        %v953 = vld [vmem:[%s348 + $0x238] sm:$0xff]
        %v954 = vld [vmem:[%s348 + $0x240] sm:$0xff]
        %v955 = vld [vmem:[%s348 + $0x248] sm:$0xff]
        %v956 = vld [vmem:[%s348 + $0x250] sm:$0xff]
        %v957 = vld [vmem:[%s348 + $0x258] sm:$0xff]
        %v958 = vld [vmem:[%s348 + $0x260] sm:$0xff]
        %v959 = vld [vmem:[%s348 + $0x268] sm:$0xff]
        %v960 = vld [vmem:[%s348 + $0x270] sm:$0xff]
        %v961 = vld [vmem:[%s348 + $0x278] sm:$0xff]
        %v962 = vld [vmem:[%s348 + $0x280] sm:$0xff]
        %v963 = vld [vmem:[%s348 + $0x288] sm:$0xff]
        %v964 = vld [vmem:[%s348 + $0x290] sm:$0xff]
        %v965 = vld [vmem:[%s348 + $0x298] sm:$0xff]
        %v966 = vld [vmem:[%s348 + $0x2a0] sm:$0xff]
        %v967 = vld [vmem:[%s348 + $0x2a8] sm:$0xff]
        %v968 = vld [vmem:[%s348 + $0x2b0] sm:$0xff]
        %v969 = vld [vmem:[%s348 + $0x2b8] sm:$0xff]
        %v970 = vld [vmem:[%s348 + $0x2c0] sm:$0xff]
        %v971 = vld [vmem:[%s348 + $0x2c8] sm:$0xff]
        %v972 = vld [vmem:[%s348 + $0x2d0] sm:$0xff]
        %v973 = vld [vmem:[%s348 + $0x2d8] sm:$0xff]
        %v974 = vld [vmem:[%s348 + $0x2e0] sm:$0xff]
        %v975 = vld [vmem:[%s348 + $0x2e8] sm:$0xff]
        %v976 = vld [vmem:[%s348 + $0x2f0] sm:$0xff]
        %v977 = vld [vmem:[%s348 + $0x2f8] sm:$0xff]
        %v978 = vld [vmem:[%s348 + $0x300] sm:$0xff]
        %v979 = vld [vmem:[%s348 + $0x308] sm:$0xff]
        %v980 = vld [vmem:[%s348 + $0x310] sm:$0xff]
        %v981 = vld [vmem:[%s348 + $0x318] sm:$0xff]
        %v982 = vld [vmem:[%s348 + $0x320] sm:$0xff]
        %v983 = vld [vmem:[%s348 + $0x328] sm:$0xff]
        %v984 = vld [vmem:[%s348 + $0x330] sm:$0xff]
        %v985 = vld [vmem:[%s348 + $0x338] sm:$0xff]
        %v986 = vld [vmem:[%s348 + $0x340] sm:$0xff]
        %v987 = vld [vmem:[%s348 + $0x348] sm:$0xff]
        %v988 = vld [vmem:[%s348 + $0x350] sm:$0xff]
        %v989 = vld [vmem:[%s348 + $0x358] sm:$0xff]
        %v990 = vld [vmem:[%s348 + $0x360] sm:$0xff]
        %v991 = vld [vmem:[%s348 + $0x368] sm:$0xff]
        %v992 = vld [vmem:[%s348 + $0x370] sm:$0xff]
        %v993 = vld [vmem:[%s348 + $0x378] sm:$0xff]
        %v994 = vld [vmem:[%s348 + $0x380] sm:$0xff]
        %v995 = vld [vmem:[%s348 + $0x388] sm:$0xff]
        %v996 = vld [vmem:[%s348 + $0x390] sm:$0xff]
        %v997 = vld [vmem:[%s348 + $0x398] sm:$0xff]
        %v998 = vld [vmem:[%s348 + $0x3a0] sm:$0xff]
        %v999 = vld [vmem:[%s348 + $0x3a8] sm:$0xff]
        %v1000 = vld [vmem:[%s348 + $0x3b0] sm:$0xff]
        %v1001 = vld [vmem:[%s348 + $0x3b8] sm:$0xff]
        %v1002 = vld [vmem:[%s348 + $0x3c0] sm:$0xff]
        %v1003 = vld [vmem:[%s348 + $0x3c8] sm:$0xff]
        %v1004 = vld [vmem:[%s348 + $0x3d0] sm:$0xff]
        %v1005 = vld [vmem:[%s348 + $0x3d8] sm:$0xff]
        %v1006 = vld [vmem:[%s348 + $0x3e0] sm:$0xff]
        %v1007 = vld [vmem:[%s348 + $0x3e8] sm:$0xff]
        %v1008 = vld [vmem:[%s348 + $0x3f0] sm:$0xff]
        %v1009 = vld [vmem:[%s348 + $0x3f8] sm:$0xff]
        %v1010 = vld [vmem:[%s348 + $0x400] sm:$0xff]
        %v1011 = vld [vmem:[%s348 + $0x408] sm:$0xff]
        %v1012 = vld [vmem:[%s348 + $0x410] sm:$0xff]
        %v1013 = vld [vmem:[%s348 + $0x418] sm:$0xff]
        %v1014 = vld [vmem:[%s348 + $0x420] sm:$0xff]
        %v1015 = vld [vmem:[%s348 + $0x428] sm:$0xff]
        %v1016 = vld [vmem:[%s348 + $0x430] sm:$0xff]
        %v1017 = vld [vmem:[%s348 + $0x438] sm:$0xff]
        %v1018 = vld [vmem:[%s348 + $0x440] sm:$0xff]
        %v1019 = vld [vmem:[%s348 + $0x448] sm:$0xff]
        %v1020 = vld [vmem:[%s348 + $0x450] sm:$0xff]
        %v1021 = vld [vmem:[%s348 + $0x458] sm:$0xff]
        %v1022 = vld [vmem:[%s348 + $0x460] sm:$0xff]
        %v1023 = vld [vmem:[%s348 + $0x468] sm:$0xff]
        %v1024 = vld [vmem:[%s348 + $0x470] sm:$0xff]
        %v1025 = vld [vmem:[%s348 + $0x478] sm:$0xff]
        %v1026 = vld [vmem:[%s348 + $0x480] sm:$0xff]
        %v1027 = vld [vmem:[%s348 + $0x488] sm:$0xff]
        %v1028 = vld [vmem:[%s348 + $0x490] sm:$0xff]
        %v1029 = vld [vmem:[%s348 + $0x498] sm:$0xff]
        %v1030 = vld [vmem:[%s348 + $0x4a0] sm:$0xff]
        %v1031 = vld [vmem:[%s348 + $0x4a8] sm:$0xff]
        %v1032 = vld [vmem:[%s348 + $0x4b0] sm:$0xff]
        %v1033 = vld [vmem:[%s348 + $0x4b8] sm:$0xff]
        %v1034 = vld [vmem:[%s348 + $0x4c0] sm:$0xff]
        %v1035 = vld [vmem:[%s348 + $0x4c8] sm:$0xff]
        %v1036 = vld [vmem:[%s348 + $0x4d0] sm:$0xff]
        %v1037 = vld [vmem:[%s348 + $0x4d8] sm:$0xff]
        %v1038 = vld [vmem:[%s348 + $0x4e0] sm:$0xff]
        %v1039 = vld [vmem:[%s348 + $0x4e8] sm:$0xff]
        %v1040 = vld [vmem:[%s348 + $0x4f0] sm:$0xff]
        %v1041 = vld [vmem:[%s348 + $0x4f8] sm:$0xff]
        %v1042 = vld [vmem:[%s348 + $0x500] sm:$0xff]
        %v1043 = vld [vmem:[%s348 + $0x508] sm:$0xff]
        %v1044 = vld [vmem:[%s348 + $0x510] sm:$0xff]
        %v1045 = vld [vmem:[%s348 + $0x518] sm:$0xff]
        %v1046 = vld [vmem:[%s348 + $0x520] sm:$0xff]
        %v1047 = vld [vmem:[%s348 + $0x528] sm:$0xff]
        %v1048 = vld [vmem:[%s348 + $0x530] sm:$0xff]
        %v1049 = vld [vmem:[%s348 + $0x538] sm:$0xff]
        %v1050 = vld [vmem:[%s348 + $0x540] sm:$0xff]
        %v1051 = vld [vmem:[%s348 + $0x548] sm:$0xff]
        %v1052 = vld [vmem:[%s348 + $0x550] sm:$0xff]
        %v1053 = vld [vmem:[%s348 + $0x558] sm:$0xff]
        %v1054 = vld [vmem:[%s348 + $0x560] sm:$0xff]
        %v1055 = vld [vmem:[%s348 + $0x568] sm:$0xff]
        %v1056 = vld [vmem:[%s348 + $0x570] sm:$0xff]
        %v1057 = vld [vmem:[%s348 + $0x578] sm:$0xff]
        %v1058 = vld [vmem:[%s348 + $0x580] sm:$0xff]
        %v1059 = vld [vmem:[%s348 + $0x588] sm:$0xff]
        %v1060 = vld [vmem:[%s348 + $0x590] sm:$0xff]
        %v1061 = vld [vmem:[%s348 + $0x598] sm:$0xff]
        %v1062 = vld [vmem:[%s348 + $0x5a0] sm:$0xff]
        %v1063 = vld [vmem:[%s348 + $0x5a8] sm:$0xff]
        %v1064 = vld [vmem:[%s348 + $0x5b0] sm:$0xff]
        %v1065 = vld [vmem:[%s348 + $0x5b8] sm:$0xff]
        %v1066 = vld [vmem:[%s348 + $0x5c0] sm:$0xff]
        %v1067 = vld [vmem:[%s348 + $0x5c8] sm:$0xff]
        %v1068 = vld [vmem:[%s348 + $0x5d0] sm:$0xff]
        %v1069 = vld [vmem:[%s348 + $0x5d8] sm:$0xff]
        %v1070 = vld [vmem:[%s348 + $0x5e0] sm:$0xff]
        %v1071 = vld [vmem:[%s348 + $0x5e8] sm:$0xff]
        %v1072 = vld [vmem:[%s348 + $0x5f0] sm:$0xff]
        %v1073 = vld [vmem:[%s348 + $0x5f8] sm:$0xff]
        %v1074 = vld [vmem:[%s348 + $0x600] sm:$0xff]
        %v1075 = vld [vmem:[%s348 + $0x608] sm:$0xff]
        %v1076 = vld [vmem:[%s348 + $0x610] sm:$0xff]
        %v1077 = vld [vmem:[%s348 + $0x618] sm:$0xff]
        %v1078 = vld [vmem:[%s348 + $0x620] sm:$0xff]
        %v1079 = vld [vmem:[%s348 + $0x628] sm:$0xff]
        %v1080 = vld [vmem:[%s348 + $0x630] sm:$0xff]
        %v1081 = vld [vmem:[%s348 + $0x638] sm:$0xff]
        %v1082 = vld [vmem:[%s348 + $0x640] sm:$0xff]
        %v1083 = vld [vmem:[%s348 + $0x648] sm:$0xff]
        %v1084 = vld [vmem:[%s348 + $0x650] sm:$0xff]
        %v1085 = vld [vmem:[%s348 + $0x658] sm:$0xff]
        %v1086 = vld [vmem:[%s348 + $0x660] sm:$0xff]
        %v1087 = vld [vmem:[%s348 + $0x668] sm:$0xff]
        %v1088 = vld [vmem:[%s348 + $0x670] sm:$0xff]
        %v1089 = vld [vmem:[%s348 + $0x678] sm:$0xff]
        %v1090 = vld [vmem:[%s348 + $0x680] sm:$0xff]
        %v1091 = vld [vmem:[%s348 + $0x688] sm:$0xff]
        %v1092 = vld [vmem:[%s348 + $0x690] sm:$0xff]
        %v1093 = vld [vmem:[%s348 + $0x698] sm:$0xff]
        %v1094 = vld [vmem:[%s348 + $0x6a0] sm:$0xff]
        %v1095 = vld [vmem:[%s348 + $0x6a8] sm:$0xff]
        %v1096 = vld [vmem:[%s348 + $0x6b0] sm:$0xff]
        %v1097 = vld [vmem:[%s348 + $0x6b8] sm:$0xff]
        %v1098 = vld [vmem:[%s348 + $0x6c0] sm:$0xff]
        %v1099 = vld [vmem:[%s348 + $0x6c8] sm:$0xff]
        %v1100 = vld [vmem:[%s348 + $0x6d0] sm:$0xff]
        %v1101 = vld [vmem:[%s348 + $0x6d8] sm:$0xff]
        %v1102 = vld [vmem:[%s348 + $0x6e0] sm:$0xff]
        %v1103 = vld [vmem:[%s348 + $0x6e8] sm:$0xff]
        %v1104 = vld [vmem:[%s348 + $0x6f0] sm:$0xff]
        %v1105 = vld [vmem:[%s348 + $0x6f8] sm:$0xff]
        %v1106 = vld [vmem:[%s348 + $0x700] sm:$0xff]
        %v1107 = vld [vmem:[%s348 + $0x708] sm:$0xff]
        %v1108 = vld [vmem:[%s348 + $0x710] sm:$0xff]
        %v1109 = vld [vmem:[%s348 + $0x718] sm:$0xff]
        %v1110 = vld [vmem:[%s348 + $0x720] sm:$0xff]
        %v1111 = vld [vmem:[%s348 + $0x728] sm:$0xff]
        %v1112 = vld [vmem:[%s348 + $0x730] sm:$0xff]
        %v1113 = vld [vmem:[%s348 + $0x738] sm:$0xff]
        %v1114 = vld [vmem:[%s348 + $0x740] sm:$0xff]
        %v1115 = vld [vmem:[%s348 + $0x748] sm:$0xff]
        %v1116 = vld [vmem:[%s348 + $0x750] sm:$0xff]
        %v1117 = vld [vmem:[%s348 + $0x758] sm:$0xff]
        %v1118 = vld [vmem:[%s348 + $0x760] sm:$0xff]
        %v1119 = vld [vmem:[%s348 + $0x768] sm:$0xff]
        %v1120 = vld [vmem:[%s348 + $0x770] sm:$0xff]
        %v1121 = vld [vmem:[%s348 + $0x778] sm:$0xff]
        %v1122 = vld [vmem:[%s348 + $0x780] sm:$0xff]
        %v1123 = vld [vmem:[%s348 + $0x788] sm:$0xff]
        %v1124 = vld [vmem:[%s348 + $0x790] sm:$0xff]
        %v1125 = vld [vmem:[%s348 + $0x798] sm:$0xff]
        %v1126 = vld [vmem:[%s348 + $0x7a0] sm:$0xff]
        %v1127 = vld [vmem:[%s348 + $0x7a8] sm:$0xff]
        %v1128 = vld [vmem:[%s348 + $0x7b0] sm:$0xff]
        %v1129 = vld [vmem:[%s348 + $0x7b8] sm:$0xff]
        %v1130 = vld [vmem:[%s348 + $0x7c0] sm:$0xff]
        %v1131 = vld [vmem:[%s348 + $0x7c8] sm:$0xff]
        %v1132 = vld [vmem:[%s348 + $0x7d0] sm:$0xff]
        %v1133 = vld [vmem:[%s348 + $0x7d8] sm:$0xff]
        %v1134 = vld [vmem:[%s348 + $0x7e0] sm:$0xff]
        %v1135 = vld [vmem:[%s348 + $0x7e8] sm:$0xff]
        %v1136 = vld [vmem:[%s348 + $0x7f0] sm:$0xff]
        %v1137 = vld [vmem:[%s348 + $0x7f8] sm:$0xff]
        %v1138 = vld [vmem:[%s357] sm:$0xf]
        %v1140 = vlaneseq
        %v1141 = vshrl.u32 %v1140, 7
        %v1142 = vsub.s32 0, %v1141
        %v1143 = vrot.slane %v1138, %v1142
        %v1144 = vlaneseq
        %v1145 = vshrl.u32 %v1144, 7
        %v1146 = vsub.s32 1, %v1145
        %v1147 = vrot.slane %v1138, %v1146
        %v1148 = vlaneseq
        %v1149 = vshrl.u32 %v1148, 7
        %v1150 = vsub.s32 2, %v1149
        %v1151 = vrot.slane %v1138, %v1150
        %v1152 = vlaneseq
        %v1153 = vshrl.u32 %v1152, 7
        %v1154 = vsub.s32 3, %v1153
        %v1155 = vrot.slane %v1138, %v1154
        %v1416 = vunpack.c.l.b16 %v882
        %v1417 = vunpack.c.h.b16 %v882
        %v1418 = vunpack.c.l.b16 %v883
        %v1419 = vunpack.c.h.b16 %v883
        %v1420 = vunpack.c.l.b16 %v884
        %v1421 = vunpack.c.h.b16 %v884
        %v1422 = vunpack.c.l.b16 %v885
        %v1423 = vunpack.c.h.b16 %v885
        %v1424 = vunpack.c.l.b16 %v886
        %v1425 = vunpack.c.h.b16 %v886
        %v1426 = vunpack.c.l.b16 %v887
        %v1427 = vunpack.c.h.b16 %v887
        %v1428 = vunpack.c.l.b16 %v888
        %v1429 = vunpack.c.h.b16 %v888
        %v1430 = vunpack.c.l.b16 %v889
        %v1431 = vunpack.c.h.b16 %v889
        %v1432 = vunpack.c.l.b16 %v890
        %v1433 = vunpack.c.h.b16 %v890
        %v1434 = vunpack.c.l.b16 %v891
        %v1435 = vunpack.c.h.b16 %v891
        %v1436 = vunpack.c.l.b16 %v892
        %v1437 = vunpack.c.h.b16 %v892
        %v1438 = vunpack.c.l.b16 %v893
        %v1439 = vunpack.c.h.b16 %v893
        %v1440 = vunpack.c.l.b16 %v894
        %v1441 = vunpack.c.h.b16 %v894
        %v1442 = vunpack.c.l.b16 %v895
        %v1443 = vunpack.c.h.b16 %v895
        %v1444 = vunpack.c.l.b16 %v896
        %v1445 = vunpack.c.h.b16 %v896
        %v1446 = vunpack.c.l.b16 %v897
        %v1447 = vunpack.c.h.b16 %v897
        %v1448 = vunpack.c.l.b16 %v898
        %v1449 = vunpack.c.h.b16 %v898
        %v1450 = vunpack.c.l.b16 %v899
        %v1451 = vunpack.c.h.b16 %v899
        %v1452 = vunpack.c.l.b16 %v900
        %v1453 = vunpack.c.h.b16 %v900
        %v1454 = vunpack.c.l.b16 %v901
        %v1455 = vunpack.c.h.b16 %v901
        %v1456 = vunpack.c.l.b16 %v902
        %v1457 = vunpack.c.h.b16 %v902
        %v1458 = vunpack.c.l.b16 %v903
        %v1459 = vunpack.c.h.b16 %v903
        %v1460 = vunpack.c.l.b16 %v904
        %v1461 = vunpack.c.h.b16 %v904
        %v1462 = vunpack.c.l.b16 %v905
        %v1463 = vunpack.c.h.b16 %v905
        %v1464 = vunpack.c.l.b16 %v906
        %v1465 = vunpack.c.h.b16 %v906
        %v1466 = vunpack.c.l.b16 %v907
        %v1467 = vunpack.c.h.b16 %v907
        %v1468 = vunpack.c.l.b16 %v908
        %v1469 = vunpack.c.h.b16 %v908
        %v1470 = vunpack.c.l.b16 %v909
        %v1471 = vunpack.c.h.b16 %v909
        %v1472 = vunpack.c.l.b16 %v910
        %v1473 = vunpack.c.h.b16 %v910
        %v1474 = vunpack.c.l.b16 %v911
        %v1475 = vunpack.c.h.b16 %v911
        %v1476 = vunpack.c.l.b16 %v912
        %v1477 = vunpack.c.h.b16 %v912
        %v1478 = vunpack.c.l.b16 %v913
        %v1479 = vunpack.c.h.b16 %v913
        %v1480 = vunpack.c.l.b16 %v914
        %v1481 = vunpack.c.h.b16 %v914
        %v1482 = vunpack.c.l.b16 %v915
        %v1483 = vunpack.c.h.b16 %v915
        %v1484 = vunpack.c.l.b16 %v916
        %v1485 = vunpack.c.h.b16 %v916
        %v1486 = vunpack.c.l.b16 %v917
        %v1487 = vunpack.c.h.b16 %v917
        %v1488 = vunpack.c.l.b16 %v918
        %v1489 = vunpack.c.h.b16 %v918
        %v1490 = vunpack.c.l.b16 %v919
        %v1491 = vunpack.c.h.b16 %v919
        %v1492 = vunpack.c.l.b16 %v920
        %v1493 = vunpack.c.h.b16 %v920
        %v1494 = vunpack.c.l.b16 %v921
        %v1495 = vunpack.c.h.b16 %v921
        %v1496 = vunpack.c.l.b16 %v922
        %v1497 = vunpack.c.h.b16 %v922
        %v1498 = vunpack.c.l.b16 %v923
        %v1499 = vunpack.c.h.b16 %v923
        %v1500 = vunpack.c.l.b16 %v924
        %v1501 = vunpack.c.h.b16 %v924
        %v1502 = vunpack.c.l.b16 %v925
        %v1503 = vunpack.c.h.b16 %v925
        %v1504 = vunpack.c.l.b16 %v926
        %v1505 = vunpack.c.h.b16 %v926
        %v1506 = vunpack.c.l.b16 %v927
        %v1507 = vunpack.c.h.b16 %v927
        %v1508 = vunpack.c.l.b16 %v928
        %v1509 = vunpack.c.h.b16 %v928
        %v1510 = vunpack.c.l.b16 %v929
        %v1511 = vunpack.c.h.b16 %v929
        %v1512 = vunpack.c.l.b16 %v930
        %v1513 = vunpack.c.h.b16 %v930
        %v1514 = vunpack.c.l.b16 %v931
        %v1515 = vunpack.c.h.b16 %v931
        %v1516 = vunpack.c.l.b16 %v932
        %v1517 = vunpack.c.h.b16 %v932
        %v1518 = vunpack.c.l.b16 %v933
        %v1519 = vunpack.c.h.b16 %v933
        %v1520 = vunpack.c.l.b16 %v934
        %v1521 = vunpack.c.h.b16 %v934
        %v1522 = vunpack.c.l.b16 %v935
        %v1523 = vunpack.c.h.b16 %v935
        %v1524 = vunpack.c.l.b16 %v936
        %v1525 = vunpack.c.h.b16 %v936
        %v1526 = vunpack.c.l.b16 %v937
        %v1527 = vunpack.c.h.b16 %v937
        %v1528 = vunpack.c.l.b16 %v938
        %v1529 = vunpack.c.h.b16 %v938
        %v1530 = vunpack.c.l.b16 %v939
        %v1531 = vunpack.c.h.b16 %v939
        %v1532 = vunpack.c.l.b16 %v940
        %v1533 = vunpack.c.h.b16 %v940
        %v1534 = vunpack.c.l.b16 %v941
        %v1535 = vunpack.c.h.b16 %v941
        %v1536 = vunpack.c.l.b16 %v942
        %v1537 = vunpack.c.h.b16 %v942
        %v1538 = vunpack.c.l.b16 %v943
        %v1539 = vunpack.c.h.b16 %v943
        %v1540 = vunpack.c.l.b16 %v944
        %v1541 = vunpack.c.h.b16 %v944
        %v1542 = vunpack.c.l.b16 %v945
        %v1543 = vunpack.c.h.b16 %v945
        %v1544 = vunpack.c.l.b16 %v946
        %v1545 = vunpack.c.h.b16 %v946
        %v1546 = vunpack.c.l.b16 %v947
        %v1547 = vunpack.c.h.b16 %v947
        %v1548 = vunpack.c.l.b16 %v948
        %v1549 = vunpack.c.h.b16 %v948
        %v1550 = vunpack.c.l.b16 %v949
        %v1551 = vunpack.c.h.b16 %v949
        %v1552 = vunpack.c.l.b16 %v950
        %v1553 = vunpack.c.h.b16 %v950
        %v1554 = vunpack.c.l.b16 %v951
        %v1555 = vunpack.c.h.b16 %v951
        %v1556 = vunpack.c.l.b16 %v952
        %v1557 = vunpack.c.h.b16 %v952
        %v1558 = vunpack.c.l.b16 %v953
        %v1559 = vunpack.c.h.b16 %v953
        %v1560 = vunpack.c.l.b16 %v954
        %v1561 = vunpack.c.h.b16 %v954
        %v1562 = vunpack.c.l.b16 %v955
        %v1563 = vunpack.c.h.b16 %v955
        %v1564 = vunpack.c.l.b16 %v956
        %v1565 = vunpack.c.h.b16 %v956
        %v1566 = vunpack.c.l.b16 %v957
        %v1567 = vunpack.c.h.b16 %v957
        %v1568 = vunpack.c.l.b16 %v958
        %v1569 = vunpack.c.h.b16 %v958
        %v1570 = vunpack.c.l.b16 %v959
        %v1571 = vunpack.c.h.b16 %v959
        %v1572 = vunpack.c.l.b16 %v960
        %v1573 = vunpack.c.h.b16 %v960
        %v1574 = vunpack.c.l.b16 %v961
        %v1575 = vunpack.c.h.b16 %v961
        %v1576 = vunpack.c.l.b16 %v962
        %v1577 = vunpack.c.h.b16 %v962
        %v1578 = vunpack.c.l.b16 %v963
        %v1579 = vunpack.c.h.b16 %v963
        %v1580 = vunpack.c.l.b16 %v964
        %v1581 = vunpack.c.h.b16 %v964
        %v1582 = vunpack.c.l.b16 %v965
        %v1583 = vunpack.c.h.b16 %v965
        %v1584 = vunpack.c.l.b16 %v966
        %v1585 = vunpack.c.h.b16 %v966
        %v1586 = vunpack.c.l.b16 %v967
        %v1587 = vunpack.c.h.b16 %v967
        %v1588 = vunpack.c.l.b16 %v968
        %v1589 = vunpack.c.h.b16 %v968
        %v1590 = vunpack.c.l.b16 %v969
        %v1591 = vunpack.c.h.b16 %v969
        %v1592 = vunpack.c.l.b16 %v970
        %v1593 = vunpack.c.h.b16 %v970
        %v1594 = vunpack.c.l.b16 %v971
        %v1595 = vunpack.c.h.b16 %v971
        %v1596 = vunpack.c.l.b16 %v972
        %v1597 = vunpack.c.h.b16 %v972
        %v1598 = vunpack.c.l.b16 %v973
        %v1599 = vunpack.c.h.b16 %v973
        %v1600 = vunpack.c.l.b16 %v974
        %v1601 = vunpack.c.h.b16 %v974
        %v1602 = vunpack.c.l.b16 %v975
        %v1603 = vunpack.c.h.b16 %v975
        %v1604 = vunpack.c.l.b16 %v976
        %v1605 = vunpack.c.h.b16 %v976
        %v1606 = vunpack.c.l.b16 %v977
        %v1607 = vunpack.c.h.b16 %v977
        %v1608 = vunpack.c.l.b16 %v978
        %v1609 = vunpack.c.h.b16 %v978
        %v1610 = vunpack.c.l.b16 %v979
        %v1611 = vunpack.c.h.b16 %v979
        %v1612 = vunpack.c.l.b16 %v980
        %v1613 = vunpack.c.h.b16 %v980
        %v1614 = vunpack.c.l.b16 %v981
        %v1615 = vunpack.c.h.b16 %v981
        %v1616 = vunpack.c.l.b16 %v982
        %v1617 = vunpack.c.h.b16 %v982
        %v1618 = vunpack.c.l.b16 %v983
        %v1619 = vunpack.c.h.b16 %v983
        %v1620 = vunpack.c.l.b16 %v984
        %v1621 = vunpack.c.h.b16 %v984
        %v1622 = vunpack.c.l.b16 %v985
        %v1623 = vunpack.c.h.b16 %v985
        %v1624 = vunpack.c.l.b16 %v986
        %v1625 = vunpack.c.h.b16 %v986
        %v1626 = vunpack.c.l.b16 %v987
        %v1627 = vunpack.c.h.b16 %v987
        %v1628 = vunpack.c.l.b16 %v988
        %v1629 = vunpack.c.h.b16 %v988
        %v1630 = vunpack.c.l.b16 %v989
        %v1631 = vunpack.c.h.b16 %v989
        %v1632 = vunpack.c.l.b16 %v990
        %v1633 = vunpack.c.h.b16 %v990
        %v1634 = vunpack.c.l.b16 %v991
        %v1635 = vunpack.c.h.b16 %v991
        %v1636 = vunpack.c.l.b16 %v992
        %v1637 = vunpack.c.h.b16 %v992
        %v1638 = vunpack.c.l.b16 %v993
        %v1639 = vunpack.c.h.b16 %v993
        %v1640 = vunpack.c.l.b16 %v994
        %v1641 = vunpack.c.h.b16 %v994
        %v1642 = vunpack.c.l.b16 %v995
        %v1643 = vunpack.c.h.b16 %v995
        %v1644 = vunpack.c.l.b16 %v996
        %v1645 = vunpack.c.h.b16 %v996
        %v1646 = vunpack.c.l.b16 %v997
        %v1647 = vunpack.c.h.b16 %v997
        %v1648 = vunpack.c.l.b16 %v998
        %v1649 = vunpack.c.h.b16 %v998
        %v1650 = vunpack.c.l.b16 %v999
        %v1651 = vunpack.c.h.b16 %v999
        %v1652 = vunpack.c.l.b16 %v1000
        %v1653 = vunpack.c.h.b16 %v1000
        %v1654 = vunpack.c.l.b16 %v1001
        %v1655 = vunpack.c.h.b16 %v1001
        %v1656 = vunpack.c.l.b16 %v1002
        %v1657 = vunpack.c.h.b16 %v1002
        %v1658 = vunpack.c.l.b16 %v1003
        %v1659 = vunpack.c.h.b16 %v1003
        %v1660 = vunpack.c.l.b16 %v1004
        %v1661 = vunpack.c.h.b16 %v1004
        %v1662 = vunpack.c.l.b16 %v1005
        %v1663 = vunpack.c.h.b16 %v1005
        %v1664 = vunpack.c.l.b16 %v1006
        %v1665 = vunpack.c.h.b16 %v1006
        %v1666 = vunpack.c.l.b16 %v1007
        %v1667 = vunpack.c.h.b16 %v1007
        %v1668 = vunpack.c.l.b16 %v1008
        %v1669 = vunpack.c.h.b16 %v1008
        %v1670 = vunpack.c.l.b16 %v1009
        %v1671 = vunpack.c.h.b16 %v1009
        %v1672 = vunpack.c.l.b16 %v1010
        %v1673 = vunpack.c.h.b16 %v1010
        %v1674 = vunpack.c.l.b16 %v1011
        %v1675 = vunpack.c.h.b16 %v1011
        %v1676 = vunpack.c.l.b16 %v1012
        %v1677 = vunpack.c.h.b16 %v1012
        %v1678 = vunpack.c.l.b16 %v1013
        %v1679 = vunpack.c.h.b16 %v1013
        %v1680 = vunpack.c.l.b16 %v1014
        %v1681 = vunpack.c.h.b16 %v1014
        %v1682 = vunpack.c.l.b16 %v1015
        %v1683 = vunpack.c.h.b16 %v1015
        %v1684 = vunpack.c.l.b16 %v1016
        %v1685 = vunpack.c.h.b16 %v1016
        %v1686 = vunpack.c.l.b16 %v1017
        %v1687 = vunpack.c.h.b16 %v1017
        %v1688 = vunpack.c.l.b16 %v1018
        %v1689 = vunpack.c.h.b16 %v1018
        %v1690 = vunpack.c.l.b16 %v1019
        %v1691 = vunpack.c.h.b16 %v1019
        %v1692 = vunpack.c.l.b16 %v1020
        %v1693 = vunpack.c.h.b16 %v1020
        %v1694 = vunpack.c.l.b16 %v1021
        %v1695 = vunpack.c.h.b16 %v1021
        %v1696 = vunpack.c.l.b16 %v1022
        %v1697 = vunpack.c.h.b16 %v1022
        %v1698 = vunpack.c.l.b16 %v1023
        %v1699 = vunpack.c.h.b16 %v1023
        %v1700 = vunpack.c.l.b16 %v1024
        %v1701 = vunpack.c.h.b16 %v1024
        %v1702 = vunpack.c.l.b16 %v1025
        %v1703 = vunpack.c.h.b16 %v1025
        %v1704 = vunpack.c.l.b16 %v1026
        %v1705 = vunpack.c.h.b16 %v1026
        %v1706 = vunpack.c.l.b16 %v1027
        %v1707 = vunpack.c.h.b16 %v1027
        %v1708 = vunpack.c.l.b16 %v1028
        %v1709 = vunpack.c.h.b16 %v1028
        %v1710 = vunpack.c.l.b16 %v1029
        %v1711 = vunpack.c.h.b16 %v1029
        %v1712 = vunpack.c.l.b16 %v1030
        %v1713 = vunpack.c.h.b16 %v1030
        %v1714 = vunpack.c.l.b16 %v1031
        %v1715 = vunpack.c.h.b16 %v1031
        %v1716 = vunpack.c.l.b16 %v1032
        %v1717 = vunpack.c.h.b16 %v1032
        %v1718 = vunpack.c.l.b16 %v1033
        %v1719 = vunpack.c.h.b16 %v1033
        %v1720 = vunpack.c.l.b16 %v1034
        %v1721 = vunpack.c.h.b16 %v1034
        %v1722 = vunpack.c.l.b16 %v1035
        %v1723 = vunpack.c.h.b16 %v1035
        %v1724 = vunpack.c.l.b16 %v1036
        %v1725 = vunpack.c.h.b16 %v1036
        %v1726 = vunpack.c.l.b16 %v1037
        %v1727 = vunpack.c.h.b16 %v1037
        %v1728 = vunpack.c.l.b16 %v1038
        %v1729 = vunpack.c.h.b16 %v1038
        %v1730 = vunpack.c.l.b16 %v1039
        %v1731 = vunpack.c.h.b16 %v1039
        %v1732 = vunpack.c.l.b16 %v1040
        %v1733 = vunpack.c.h.b16 %v1040
        %v1734 = vunpack.c.l.b16 %v1041
        %v1735 = vunpack.c.h.b16 %v1041
        %v1736 = vunpack.c.l.b16 %v1042
        %v1737 = vunpack.c.h.b16 %v1042
        %v1738 = vunpack.c.l.b16 %v1043
        %v1739 = vunpack.c.h.b16 %v1043
        %v1740 = vunpack.c.l.b16 %v1044
        %v1741 = vunpack.c.h.b16 %v1044
        %v1742 = vunpack.c.l.b16 %v1045
        %v1743 = vunpack.c.h.b16 %v1045
        %v1744 = vunpack.c.l.b16 %v1046
        %v1745 = vunpack.c.h.b16 %v1046
        %v1746 = vunpack.c.l.b16 %v1047
        %v1747 = vunpack.c.h.b16 %v1047
        %v1748 = vunpack.c.l.b16 %v1048
        %v1749 = vunpack.c.h.b16 %v1048
        %v1750 = vunpack.c.l.b16 %v1049
        %v1751 = vunpack.c.h.b16 %v1049
        %v1752 = vunpack.c.l.b16 %v1050
        %v1753 = vunpack.c.h.b16 %v1050
        %v1754 = vunpack.c.l.b16 %v1051
        %v1755 = vunpack.c.h.b16 %v1051
        %v1756 = vunpack.c.l.b16 %v1052
        %v1757 = vunpack.c.h.b16 %v1052
        %v1758 = vunpack.c.l.b16 %v1053
        %v1759 = vunpack.c.h.b16 %v1053
        %v1760 = vunpack.c.l.b16 %v1054
        %v1761 = vunpack.c.h.b16 %v1054
        %v1762 = vunpack.c.l.b16 %v1055
        %v1763 = vunpack.c.h.b16 %v1055
        %v1764 = vunpack.c.l.b16 %v1056
        %v1765 = vunpack.c.h.b16 %v1056
        %v1766 = vunpack.c.l.b16 %v1057
        %v1767 = vunpack.c.h.b16 %v1057
        %v1768 = vunpack.c.l.b16 %v1058
        %v1769 = vunpack.c.h.b16 %v1058
        %v1770 = vunpack.c.l.b16 %v1059
        %v1771 = vunpack.c.h.b16 %v1059
        %v1772 = vunpack.c.l.b16 %v1060
        %v1773 = vunpack.c.h.b16 %v1060
        %v1774 = vunpack.c.l.b16 %v1061
        %v1775 = vunpack.c.h.b16 %v1061
        %v1776 = vunpack.c.l.b16 %v1062
        %v1777 = vunpack.c.h.b16 %v1062
        %v1778 = vunpack.c.l.b16 %v1063
        %v1779 = vunpack.c.h.b16 %v1063
        %v1780 = vunpack.c.l.b16 %v1064
        %v1781 = vunpack.c.h.b16 %v1064
        %v1782 = vunpack.c.l.b16 %v1065
        %v1783 = vunpack.c.h.b16 %v1065
        %v1784 = vunpack.c.l.b16 %v1066
        %v1785 = vunpack.c.h.b16 %v1066
        %v1786 = vunpack.c.l.b16 %v1067
        %v1787 = vunpack.c.h.b16 %v1067
        %v1788 = vunpack.c.l.b16 %v1068
        %v1789 = vunpack.c.h.b16 %v1068
        %v1790 = vunpack.c.l.b16 %v1069
        %v1791 = vunpack.c.h.b16 %v1069
        %v1792 = vunpack.c.l.b16 %v1070
        %v1793 = vunpack.c.h.b16 %v1070
        %v1794 = vunpack.c.l.b16 %v1071
        %v1795 = vunpack.c.h.b16 %v1071
        %v1796 = vunpack.c.l.b16 %v1072
        %v1797 = vunpack.c.h.b16 %v1072
        %v1798 = vunpack.c.l.b16 %v1073
        %v1799 = vunpack.c.h.b16 %v1073
        %v1800 = vunpack.c.l.b16 %v1074
        %v1801 = vunpack.c.h.b16 %v1074
        %v1802 = vunpack.c.l.b16 %v1075
        %v1803 = vunpack.c.h.b16 %v1075
        %v1804 = vunpack.c.l.b16 %v1076
        %v1805 = vunpack.c.h.b16 %v1076
        %v1806 = vunpack.c.l.b16 %v1077
        %v1807 = vunpack.c.h.b16 %v1077
        %v1808 = vunpack.c.l.b16 %v1078
        %v1809 = vunpack.c.h.b16 %v1078
        %v1810 = vunpack.c.l.b16 %v1079
        %v1811 = vunpack.c.h.b16 %v1079
        %v1812 = vunpack.c.l.b16 %v1080
        %v1813 = vunpack.c.h.b16 %v1080
        %v1814 = vunpack.c.l.b16 %v1081
        %v1815 = vunpack.c.h.b16 %v1081
        %v1816 = vunpack.c.l.b16 %v1082
        %v1817 = vunpack.c.h.b16 %v1082
        %v1818 = vunpack.c.l.b16 %v1083
        %v1819 = vunpack.c.h.b16 %v1083
        %v1820 = vunpack.c.l.b16 %v1084
        %v1821 = vunpack.c.h.b16 %v1084
        %v1822 = vunpack.c.l.b16 %v1085
        %v1823 = vunpack.c.h.b16 %v1085
        %v1824 = vunpack.c.l.b16 %v1086
        %v1825 = vunpack.c.h.b16 %v1086
        %v1826 = vunpack.c.l.b16 %v1087
        %v1827 = vunpack.c.h.b16 %v1087
        %v1828 = vunpack.c.l.b16 %v1088
        %v1829 = vunpack.c.h.b16 %v1088
        %v1830 = vunpack.c.l.b16 %v1089
        %v1831 = vunpack.c.h.b16 %v1089
        %v1832 = vunpack.c.l.b16 %v1090
        %v1833 = vunpack.c.h.b16 %v1090
        %v1834 = vunpack.c.l.b16 %v1091
        %v1835 = vunpack.c.h.b16 %v1091
        %v1836 = vunpack.c.l.b16 %v1092
        %v1837 = vunpack.c.h.b16 %v1092
        %v1838 = vunpack.c.l.b16 %v1093
        %v1839 = vunpack.c.h.b16 %v1093
        %v1840 = vunpack.c.l.b16 %v1094
        %v1841 = vunpack.c.h.b16 %v1094
        %v1842 = vunpack.c.l.b16 %v1095
        %v1843 = vunpack.c.h.b16 %v1095
        %v1844 = vunpack.c.l.b16 %v1096
        %v1845 = vunpack.c.h.b16 %v1096
        %v1846 = vunpack.c.l.b16 %v1097
        %v1847 = vunpack.c.h.b16 %v1097
        %v1848 = vunpack.c.l.b16 %v1098
        %v1849 = vunpack.c.h.b16 %v1098
        %v1850 = vunpack.c.l.b16 %v1099
        %v1851 = vunpack.c.h.b16 %v1099
        %v1852 = vunpack.c.l.b16 %v1100
        %v1853 = vunpack.c.h.b16 %v1100
        %v1854 = vunpack.c.l.b16 %v1101
        %v1855 = vunpack.c.h.b16 %v1101
        %v1856 = vunpack.c.l.b16 %v1102
        %v1857 = vunpack.c.h.b16 %v1102
        %v1858 = vunpack.c.l.b16 %v1103
        %v1859 = vunpack.c.h.b16 %v1103
        %v1860 = vunpack.c.l.b16 %v1104
        %v1861 = vunpack.c.h.b16 %v1104
        %v1862 = vunpack.c.l.b16 %v1105
        %v1863 = vunpack.c.h.b16 %v1105
        %v1864 = vunpack.c.l.b16 %v1106
        %v1865 = vunpack.c.h.b16 %v1106
        %v1866 = vunpack.c.l.b16 %v1107
        %v1867 = vunpack.c.h.b16 %v1107
        %v1868 = vunpack.c.l.b16 %v1108
        %v1869 = vunpack.c.h.b16 %v1108
        %v1870 = vunpack.c.l.b16 %v1109
        %v1871 = vunpack.c.h.b16 %v1109
        %v1872 = vunpack.c.l.b16 %v1110
        %v1873 = vunpack.c.h.b16 %v1110
        %v1874 = vunpack.c.l.b16 %v1111
        %v1875 = vunpack.c.h.b16 %v1111
        %v1876 = vunpack.c.l.b16 %v1112
        %v1877 = vunpack.c.h.b16 %v1112
        %v1878 = vunpack.c.l.b16 %v1113
        %v1879 = vunpack.c.h.b16 %v1113
        %v1880 = vunpack.c.l.b16 %v1114
        %v1881 = vunpack.c.h.b16 %v1114
        %v1882 = vunpack.c.l.b16 %v1115
        %v1883 = vunpack.c.h.b16 %v1115
        %v1884 = vunpack.c.l.b16 %v1116
        %v1885 = vunpack.c.h.b16 %v1116
        %v1886 = vunpack.c.l.b16 %v1117
        %v1887 = vunpack.c.h.b16 %v1117
        %v1888 = vunpack.c.l.b16 %v1118
        %v1889 = vunpack.c.h.b16 %v1118
        %v1890 = vunpack.c.l.b16 %v1119
        %v1891 = vunpack.c.h.b16 %v1119
        %v1892 = vunpack.c.l.b16 %v1120
        %v1893 = vunpack.c.h.b16 %v1120
        %v1894 = vunpack.c.l.b16 %v1121
        %v1895 = vunpack.c.h.b16 %v1121
        %v1896 = vunpack.c.l.b16 %v1122
        %v1897 = vunpack.c.h.b16 %v1122
        %v1898 = vunpack.c.l.b16 %v1123
        %v1899 = vunpack.c.h.b16 %v1123
        %v1900 = vunpack.c.l.b16 %v1124
        %v1901 = vunpack.c.h.b16 %v1124
        %v1902 = vunpack.c.l.b16 %v1125
        %v1903 = vunpack.c.h.b16 %v1125
        %v1904 = vunpack.c.l.b16 %v1126
        %v1905 = vunpack.c.h.b16 %v1126
        %v1906 = vunpack.c.l.b16 %v1127
        %v1907 = vunpack.c.h.b16 %v1127
        %v1908 = vunpack.c.l.b16 %v1128
        %v1909 = vunpack.c.h.b16 %v1128
        %v1910 = vunpack.c.l.b16 %v1129
        %v1911 = vunpack.c.h.b16 %v1129
        %v1912 = vunpack.c.l.b16 %v1130
        %v1913 = vunpack.c.h.b16 %v1130
        %v1914 = vunpack.c.l.b16 %v1131
        %v1915 = vunpack.c.h.b16 %v1131
        %v1916 = vunpack.c.l.b16 %v1132
        %v1917 = vunpack.c.h.b16 %v1132
        %v1918 = vunpack.c.l.b16 %v1133
        %v1919 = vunpack.c.h.b16 %v1133
        %v1920 = vunpack.c.l.b16 %v1134
        %v1921 = vunpack.c.h.b16 %v1134
        %v1922 = vunpack.c.l.b16 %v1135
        %v1923 = vunpack.c.h.b16 %v1135
        %v1924 = vunpack.c.l.b16 %v1136
        %v1925 = vunpack.c.h.b16 %v1136
        %v1926 = vunpack.c.l.b16 %v1137
        %v1927 = vunpack.c.h.b16 %v1137
        %v1928 = vpack.c.b16 %v1420, %v1416
        %v1929 = vpack.c.b16 %v1421, %v1417
        %v1930 = vpack.c.b16 %v1422, %v1418
        %v1931 = vpack.c.b16 %v1423, %v1419
        %v1932 = vpack.c.b16 %v1428, %v1424
        %v1933 = vpack.c.b16 %v1429, %v1425
        %v1934 = vpack.c.b16 %v1430, %v1426
        %v1935 = vpack.c.b16 %v1431, %v1427
        %v1936 = vpack.c.b16 %v1436, %v1432
        %v1937 = vpack.c.b16 %v1437, %v1433
        %v1938 = vpack.c.b16 %v1438, %v1434
        %v1939 = vpack.c.b16 %v1439, %v1435
        %v1940 = vpack.c.b16 %v1444, %v1440
        %v1941 = vpack.c.b16 %v1445, %v1441
        %v1942 = vpack.c.b16 %v1446, %v1442
        %v1943 = vpack.c.b16 %v1447, %v1443
        %v1944 = vpack.c.b16 %v1452, %v1448
        %v1945 = vpack.c.b16 %v1453, %v1449
        %v1946 = vpack.c.b16 %v1454, %v1450
        %v1947 = vpack.c.b16 %v1455, %v1451
        %v1948 = vpack.c.b16 %v1460, %v1456
        %v1949 = vpack.c.b16 %v1461, %v1457
        %v1950 = vpack.c.b16 %v1462, %v1458
        %v1951 = vpack.c.b16 %v1463, %v1459
        %v1952 = vpack.c.b16 %v1468, %v1464
        %v1953 = vpack.c.b16 %v1469, %v1465
        %v1954 = vpack.c.b16 %v1470, %v1466
        %v1955 = vpack.c.b16 %v1471, %v1467
        %v1956 = vpack.c.b16 %v1476, %v1472
        %v1957 = vpack.c.b16 %v1477, %v1473
        %v1958 = vpack.c.b16 %v1478, %v1474
        %v1959 = vpack.c.b16 %v1479, %v1475
        %v1960 = vpack.c.b16 %v1484, %v1480
        %v1961 = vpack.c.b16 %v1485, %v1481
        %v1962 = vpack.c.b16 %v1486, %v1482
        %v1963 = vpack.c.b16 %v1487, %v1483
        %v1964 = vpack.c.b16 %v1492, %v1488
        %v1965 = vpack.c.b16 %v1493, %v1489
        %v1966 = vpack.c.b16 %v1494, %v1490
        %v1967 = vpack.c.b16 %v1495, %v1491
        %v1968 = vpack.c.b16 %v1500, %v1496
        %v1969 = vpack.c.b16 %v1501, %v1497
        %v1970 = vpack.c.b16 %v1502, %v1498
        %v1971 = vpack.c.b16 %v1503, %v1499
        %v1972 = vpack.c.b16 %v1508, %v1504
        %v1973 = vpack.c.b16 %v1509, %v1505
        %v1974 = vpack.c.b16 %v1510, %v1506
        %v1975 = vpack.c.b16 %v1511, %v1507
        %v1976 = vpack.c.b16 %v1516, %v1512
        %v1977 = vpack.c.b16 %v1517, %v1513
        %v1978 = vpack.c.b16 %v1518, %v1514
        %v1979 = vpack.c.b16 %v1519, %v1515
        %v1980 = vpack.c.b16 %v1524, %v1520
        %v1981 = vpack.c.b16 %v1525, %v1521
        %v1982 = vpack.c.b16 %v1526, %v1522
        %v1983 = vpack.c.b16 %v1527, %v1523
        %v1984 = vpack.c.b16 %v1532, %v1528
        %v1985 = vpack.c.b16 %v1533, %v1529
        %v1986 = vpack.c.b16 %v1534, %v1530
        %v1987 = vpack.c.b16 %v1535, %v1531
        %v1988 = vpack.c.b16 %v1540, %v1536
        %v1989 = vpack.c.b16 %v1541, %v1537
        %v1990 = vpack.c.b16 %v1542, %v1538
        %v1991 = vpack.c.b16 %v1543, %v1539
        %v1992 = vpack.c.b16 %v1548, %v1544
        %v1993 = vpack.c.b16 %v1549, %v1545
        %v1994 = vpack.c.b16 %v1550, %v1546
        %v1995 = vpack.c.b16 %v1551, %v1547
        %v1996 = vpack.c.b16 %v1556, %v1552
        %v1997 = vpack.c.b16 %v1557, %v1553
        %v1998 = vpack.c.b16 %v1558, %v1554
        %v1999 = vpack.c.b16 %v1559, %v1555
        %v2000 = vpack.c.b16 %v1564, %v1560
        %v2001 = vpack.c.b16 %v1565, %v1561
        %v2002 = vpack.c.b16 %v1566, %v1562
        %v2003 = vpack.c.b16 %v1567, %v1563
        %v2004 = vpack.c.b16 %v1572, %v1568
        %v2005 = vpack.c.b16 %v1573, %v1569
        %v2006 = vpack.c.b16 %v1574, %v1570
        %v2007 = vpack.c.b16 %v1575, %v1571
        %v2008 = vpack.c.b16 %v1580, %v1576
        %v2009 = vpack.c.b16 %v1581, %v1577
        %v2010 = vpack.c.b16 %v1582, %v1578
        %v2011 = vpack.c.b16 %v1583, %v1579
        %v2012 = vpack.c.b16 %v1588, %v1584
        %v2013 = vpack.c.b16 %v1589, %v1585
        %v2014 = vpack.c.b16 %v1590, %v1586
        %v2015 = vpack.c.b16 %v1591, %v1587
        %v2016 = vpack.c.b16 %v1596, %v1592
        %v2017 = vpack.c.b16 %v1597, %v1593
        %v2018 = vpack.c.b16 %v1598, %v1594
        %v2019 = vpack.c.b16 %v1599, %v1595
        %v2020 = vpack.c.b16 %v1604, %v1600
        %v2021 = vpack.c.b16 %v1605, %v1601
        %v2022 = vpack.c.b16 %v1606, %v1602
        %v2023 = vpack.c.b16 %v1607, %v1603
        %v2024 = vpack.c.b16 %v1612, %v1608
        %v2025 = vpack.c.b16 %v1613, %v1609
        %v2026 = vpack.c.b16 %v1614, %v1610
        %v2027 = vpack.c.b16 %v1615, %v1611
        %v2028 = vpack.c.b16 %v1620, %v1616
        %v2029 = vpack.c.b16 %v1621, %v1617
        %v2030 = vpack.c.b16 %v1622, %v1618
        %v2031 = vpack.c.b16 %v1623, %v1619
        %v2032 = vpack.c.b16 %v1628, %v1624
        %v2033 = vpack.c.b16 %v1629, %v1625
        %v2034 = vpack.c.b16 %v1630, %v1626
        %v2035 = vpack.c.b16 %v1631, %v1627
        %v2036 = vpack.c.b16 %v1636, %v1632
        %v2037 = vpack.c.b16 %v1637, %v1633
        %v2038 = vpack.c.b16 %v1638, %v1634
        %v2039 = vpack.c.b16 %v1639, %v1635
        %v2040 = vpack.c.b16 %v1644, %v1640
        %v2041 = vpack.c.b16 %v1645, %v1641
        %v2042 = vpack.c.b16 %v1646, %v1642
        %v2043 = vpack.c.b16 %v1647, %v1643
        %v2044 = vpack.c.b16 %v1652, %v1648
        %v2045 = vpack.c.b16 %v1653, %v1649
        %v2046 = vpack.c.b16 %v1654, %v1650
        %v2047 = vpack.c.b16 %v1655, %v1651
        %v2048 = vpack.c.b16 %v1660, %v1656
        %v2049 = vpack.c.b16 %v1661, %v1657
        %v2050 = vpack.c.b16 %v1662, %v1658
        %v2051 = vpack.c.b16 %v1663, %v1659
        %v2052 = vpack.c.b16 %v1668, %v1664
        %v2053 = vpack.c.b16 %v1669, %v1665
        %v2054 = vpack.c.b16 %v1670, %v1666
        %v2055 = vpack.c.b16 %v1671, %v1667
        %v2056 = vpack.c.b16 %v1676, %v1672
        %v2057 = vpack.c.b16 %v1677, %v1673
        %v2058 = vpack.c.b16 %v1678, %v1674
        %v2059 = vpack.c.b16 %v1679, %v1675
        %v2060 = vpack.c.b16 %v1684, %v1680
        %v2061 = vpack.c.b16 %v1685, %v1681
        %v2062 = vpack.c.b16 %v1686, %v1682
        %v2063 = vpack.c.b16 %v1687, %v1683
        %v2064 = vpack.c.b16 %v1692, %v1688
        %v2065 = vpack.c.b16 %v1693, %v1689
        %v2066 = vpack.c.b16 %v1694, %v1690
        %v2067 = vpack.c.b16 %v1695, %v1691
        %v2068 = vpack.c.b16 %v1700, %v1696
        %v2069 = vpack.c.b16 %v1701, %v1697
        %v2070 = vpack.c.b16 %v1702, %v1698
        %v2071 = vpack.c.b16 %v1703, %v1699
        %v2072 = vpack.c.b16 %v1708, %v1704
        %v2073 = vpack.c.b16 %v1709, %v1705
        %v2074 = vpack.c.b16 %v1710, %v1706
        %v2075 = vpack.c.b16 %v1711, %v1707
        %v2076 = vpack.c.b16 %v1716, %v1712
        %v2077 = vpack.c.b16 %v1717, %v1713
        %v2078 = vpack.c.b16 %v1718, %v1714
        %v2079 = vpack.c.b16 %v1719, %v1715
        %v2080 = vpack.c.b16 %v1724, %v1720
        %v2081 = vpack.c.b16 %v1725, %v1721
        %v2082 = vpack.c.b16 %v1726, %v1722
        %v2083 = vpack.c.b16 %v1727, %v1723
        %v2084 = vpack.c.b16 %v1732, %v1728
        %v2085 = vpack.c.b16 %v1733, %v1729
        %v2086 = vpack.c.b16 %v1734, %v1730
        %v2087 = vpack.c.b16 %v1735, %v1731
        %v2088 = vpack.c.b16 %v1740, %v1736
        %v2089 = vpack.c.b16 %v1741, %v1737
        %v2090 = vpack.c.b16 %v1742, %v1738
        %v2091 = vpack.c.b16 %v1743, %v1739
        %v2092 = vpack.c.b16 %v1748, %v1744
        %v2093 = vpack.c.b16 %v1749, %v1745
        %v2094 = vpack.c.b16 %v1750, %v1746
        %v2095 = vpack.c.b16 %v1751, %v1747
        %v2096 = vpack.c.b16 %v1756, %v1752
        %v2097 = vpack.c.b16 %v1757, %v1753
        %v2098 = vpack.c.b16 %v1758, %v1754
        %v2099 = vpack.c.b16 %v1759, %v1755
        %v2100 = vpack.c.b16 %v1764, %v1760
        %v2101 = vpack.c.b16 %v1765, %v1761
        %v2102 = vpack.c.b16 %v1766, %v1762
        %v2103 = vpack.c.b16 %v1767, %v1763
        %v2104 = vpack.c.b16 %v1772, %v1768
        %v2105 = vpack.c.b16 %v1773, %v1769
        %v2106 = vpack.c.b16 %v1774, %v1770
        %v2107 = vpack.c.b16 %v1775, %v1771
        %v2108 = vpack.c.b16 %v1780, %v1776
        %v2109 = vpack.c.b16 %v1781, %v1777
        %v2110 = vpack.c.b16 %v1782, %v1778
        %v2111 = vpack.c.b16 %v1783, %v1779
        %v2112 = vpack.c.b16 %v1788, %v1784
        %v2113 = vpack.c.b16 %v1789, %v1785
        %v2114 = vpack.c.b16 %v1790, %v1786
        %v2115 = vpack.c.b16 %v1791, %v1787
        %v2116 = vpack.c.b16 %v1796, %v1792
        %v2117 = vpack.c.b16 %v1797, %v1793
        %v2118 = vpack.c.b16 %v1798, %v1794
        %v2119 = vpack.c.b16 %v1799, %v1795
        %v2120 = vpack.c.b16 %v1804, %v1800
        %v2121 = vpack.c.b16 %v1805, %v1801
        %v2122 = vpack.c.b16 %v1806, %v1802
        %v2123 = vpack.c.b16 %v1807, %v1803
        %v2124 = vpack.c.b16 %v1812, %v1808
        %v2125 = vpack.c.b16 %v1813, %v1809
        %v2126 = vpack.c.b16 %v1814, %v1810
        %v2127 = vpack.c.b16 %v1815, %v1811
        %v2128 = vpack.c.b16 %v1820, %v1816
        %v2129 = vpack.c.b16 %v1821, %v1817
        %v2130 = vpack.c.b16 %v1822, %v1818
        %v2131 = vpack.c.b16 %v1823, %v1819
        %v2132 = vpack.c.b16 %v1828, %v1824
        %v2133 = vpack.c.b16 %v1829, %v1825
        %v2134 = vpack.c.b16 %v1830, %v1826
        %v2135 = vpack.c.b16 %v1831, %v1827
        %v2136 = vpack.c.b16 %v1836, %v1832
        %v2137 = vpack.c.b16 %v1837, %v1833
        %v2138 = vpack.c.b16 %v1838, %v1834
        %v2139 = vpack.c.b16 %v1839, %v1835
        %v2140 = vpack.c.b16 %v1844, %v1840
        %v2141 = vpack.c.b16 %v1845, %v1841
        %v2142 = vpack.c.b16 %v1846, %v1842
        %v2143 = vpack.c.b16 %v1847, %v1843
        %v2144 = vpack.c.b16 %v1852, %v1848
        %v2145 = vpack.c.b16 %v1853, %v1849
        %v2146 = vpack.c.b16 %v1854, %v1850
        %v2147 = vpack.c.b16 %v1855, %v1851
        %v2148 = vpack.c.b16 %v1860, %v1856
        %v2149 = vpack.c.b16 %v1861, %v1857
        %v2150 = vpack.c.b16 %v1862, %v1858
        %v2151 = vpack.c.b16 %v1863, %v1859
        %v2152 = vpack.c.b16 %v1868, %v1864
        %v2153 = vpack.c.b16 %v1869, %v1865
        %v2154 = vpack.c.b16 %v1870, %v1866
        %v2155 = vpack.c.b16 %v1871, %v1867
        %v2156 = vpack.c.b16 %v1876, %v1872
        %v2157 = vpack.c.b16 %v1877, %v1873
        %v2158 = vpack.c.b16 %v1878, %v1874
        %v2159 = vpack.c.b16 %v1879, %v1875
        %v2160 = vpack.c.b16 %v1884, %v1880
        %v2161 = vpack.c.b16 %v1885, %v1881
        %v2162 = vpack.c.b16 %v1886, %v1882
        %v2163 = vpack.c.b16 %v1887, %v1883
        %v2164 = vpack.c.b16 %v1892, %v1888
        %v2165 = vpack.c.b16 %v1893, %v1889
        %v2166 = vpack.c.b16 %v1894, %v1890
        %v2167 = vpack.c.b16 %v1895, %v1891
        %v2168 = vpack.c.b16 %v1900, %v1896
        %v2169 = vpack.c.b16 %v1901, %v1897
        %v2170 = vpack.c.b16 %v1902, %v1898
        %v2171 = vpack.c.b16 %v1903, %v1899
        %v2172 = vpack.c.b16 %v1908, %v1904
        %v2173 = vpack.c.b16 %v1909, %v1905
        %v2174 = vpack.c.b16 %v1910, %v1906
        %v2175 = vpack.c.b16 %v1911, %v1907
        %v2176 = vpack.c.b16 %v1916, %v1912
        %v2177 = vpack.c.b16 %v1917, %v1913
        %v2178 = vpack.c.b16 %v1918, %v1914
        %v2179 = vpack.c.b16 %v1919, %v1915
        %v2180 = vpack.c.b16 %v1924, %v1920
        %v2181 = vpack.c.b16 %v1925, %v1921
        %v2182 = vpack.c.b16 %v1926, %v1922
        %v2183 = vpack.c.b16 %v1927, %v1923
        %2440 = vmatprep.subr.bf16.mxu0 %v1929
        %2441 = vmatpush1.bf16.msra.mxu0 %v1928
        %2442 = vmatprep.subr.bf16.mxu0 %v1933
        %2443 = vmatpush1.bf16.msra.mxu0 %v1932
        %2444 = vmatprep.subr.bf16.mxu0 %v1937
        %2445 = vmatpush1.bf16.msra.mxu0 %v1936
        %2446 = vmatprep.subr.bf16.mxu0 %v1941
        %2447 = vmatpush1.bf16.msra.mxu0 %v1940
        %2448 = vmatprep.subr.bf16.mxu0 %v1945
        %2449 = vmatpush1.bf16.msra.mxu0 %v1944
        %2450 = vmatprep.subr.bf16.mxu0 %v1949
        %2451 = vmatpush1.bf16.msra.mxu0 %v1948
        %2452 = vmatprep.subr.bf16.mxu0 %v1953
        %2453 = vmatpush1.bf16.msra.mxu0 %v1952
        %2454 = vmatprep.subr.bf16.mxu0 %v1957
        %2455 = vmatpush1.bf16.msra.mxu0 %v1956
        %2456 = vmatprep.subr.bf16.mxu0 %v1961
        %2457 = vmatpush1.bf16.msra.mxu0 %v1960
        %2458 = vmatprep.subr.bf16.mxu0 %v1965
        %2459 = vmatpush1.bf16.msra.mxu0 %v1964
        %2460 = vmatprep.subr.bf16.mxu0 %v1969
        %2461 = vmatpush1.bf16.msra.mxu0 %v1968
        %2462 = vmatprep.subr.bf16.mxu0 %v1973
        %2463 = vmatpush1.bf16.msra.mxu0 %v1972
        %2464 = vmatprep.subr.bf16.mxu0 %v1977
        %2465 = vmatpush1.bf16.msra.mxu0 %v1976
        %2466 = vmatprep.subr.bf16.mxu0 %v1981
        %2467 = vmatpush1.bf16.msra.mxu0 %v1980
        %2468 = vmatprep.subr.bf16.mxu0 %v1985
        %2469 = vmatpush1.bf16.msra.mxu0 %v1984
        %2470 = vmatprep.subr.bf16.mxu0 %v1989
        %2471 = vmatpush1.bf16.msra.mxu0 %v1988
        %2472 = vmatprep.mubr.bf16.mxu0 %v875
        %2473 = vmatmul.mubr.bf16.gmra.mrb[0].mxu0 %v874
        %v2474 = vpop.f32.mrb[0].mxu0
        %v2475 = vadd.f32 %v1143, %v2474
        %v2476 = vpop.f32.mrb[0].mxu0
        %v2477 = vadd.f32 %v1147, %v2476
        %v2478 = vpop.f32.mrb[0].mxu0
        %v2479 = vadd.f32 %v1143, %v2478
        %v2480 = vpop.f32.mrb[0].mxu0
        %v2481 = vadd.f32 %v1147, %v2480
        %2482 = vdwg.mxu0
        %2483 = vmatprep.subr.bf16.mxu0 %v1993
        %2484 = vmatpush1.bf16.msra.mxu0 %v1992
        %2485 = vmatprep.subr.bf16.mxu0 %v1997
        %2486 = vmatpush1.bf16.msra.mxu0 %v1996
        %2487 = vmatprep.subr.bf16.mxu0 %v2001
        %2488 = vmatpush1.bf16.msra.mxu0 %v2000
        %2489 = vmatprep.subr.bf16.mxu0 %v2005
        %2490 = vmatpush1.bf16.msra.mxu0 %v2004
        %2491 = vmatprep.subr.bf16.mxu0 %v2009
        %2492 = vmatpush1.bf16.msra.mxu0 %v2008
        %2493 = vmatprep.subr.bf16.mxu0 %v2013
        %2494 = vmatpush1.bf16.msra.mxu0 %v2012
        %2495 = vmatprep.subr.bf16.mxu0 %v2017
        %2496 = vmatpush1.bf16.msra.mxu0 %v2016
        %2497 = vmatprep.subr.bf16.mxu0 %v2021
        %2498 = vmatpush1.bf16.msra.mxu0 %v2020
        %2499 = vmatprep.subr.bf16.mxu0 %v2025
        %2500 = vmatpush1.bf16.msra.mxu0 %v2024
        %2501 = vmatprep.subr.bf16.mxu0 %v2029
        %2502 = vmatpush1.bf16.msra.mxu0 %v2028
        %2503 = vmatprep.subr.bf16.mxu0 %v2033
        %2504 = vmatpush1.bf16.msra.mxu0 %v2032
        %2505 = vmatprep.subr.bf16.mxu0 %v2037
        %2506 = vmatpush1.bf16.msra.mxu0 %v2036
        %2507 = vmatprep.subr.bf16.mxu0 %v2041
        %2508 = vmatpush1.bf16.msra.mxu0 %v2040
        %2509 = vmatprep.subr.bf16.mxu0 %v2045
        %2510 = vmatpush1.bf16.msra.mxu0 %v2044
        %2511 = vmatprep.subr.bf16.mxu0 %v2049
        %2512 = vmatpush1.bf16.msra.mxu0 %v2048
        %2513 = vmatprep.subr.bf16.mxu0 %v2053
        %2514 = vmatpush1.bf16.msra.mxu0 %v2052
        %2515 = vmatprep.mubr.bf16.mxu0 %v877
        %2516 = vmatmul.mubr.bf16.gmra.mrb[0].mxu0 %v876
        %v2517 = vpop.f32.mrb[0].mxu0
        %v2518 = vadd.f32 %v2475, %v2517
        %v2519 = vpop.f32.mrb[0].mxu0
        %v2520 = vadd.f32 %v2477, %v2519
        %v2521 = vpop.f32.mrb[0].mxu0
        %v2522 = vadd.f32 %v2479, %v2521
        %v2523 = vpop.f32.mrb[0].mxu0
        %v2524 = vadd.f32 %v2481, %v2523
        %2525 = vdwg.mxu0
        %2526 = vmatprep.subr.bf16.mxu0 %v2057
        %2527 = vmatpush1.bf16.msra.mxu0 %v2056
        %2528 = vmatprep.subr.bf16.mxu0 %v2061
        %2529 = vmatpush1.bf16.msra.mxu0 %v2060
        %2530 = vmatprep.subr.bf16.mxu0 %v2065
        %2531 = vmatpush1.bf16.msra.mxu0 %v2064
        %2532 = vmatprep.subr.bf16.mxu0 %v2069
        %2533 = vmatpush1.bf16.msra.mxu0 %v2068
        %2534 = vmatprep.subr.bf16.mxu0 %v2073
        %2535 = vmatpush1.bf16.msra.mxu0 %v2072
        %2536 = vmatprep.subr.bf16.mxu0 %v2077
        %2537 = vmatpush1.bf16.msra.mxu0 %v2076
        %2538 = vmatprep.subr.bf16.mxu0 %v2081
        %2539 = vmatpush1.bf16.msra.mxu0 %v2080
        %2540 = vmatprep.subr.bf16.mxu0 %v2085
        %2541 = vmatpush1.bf16.msra.mxu0 %v2084
        %2542 = vmatprep.subr.bf16.mxu0 %v2089
        %2543 = vmatpush1.bf16.msra.mxu0 %v2088
        %2544 = vmatprep.subr.bf16.mxu0 %v2093
        %2545 = vmatpush1.bf16.msra.mxu0 %v2092
        %2546 = vmatprep.subr.bf16.mxu0 %v2097
        %2547 = vmatpush1.bf16.msra.mxu0 %v2096
        %2548 = vmatprep.subr.bf16.mxu0 %v2101
        %2549 = vmatpush1.bf16.msra.mxu0 %v2100
        %2550 = vmatprep.subr.bf16.mxu0 %v2105
        %2551 = vmatpush1.bf16.msra.mxu0 %v2104
        %2552 = vmatprep.subr.bf16.mxu0 %v2109
        %2553 = vmatpush1.bf16.msra.mxu0 %v2108
        %2554 = vmatprep.subr.bf16.mxu0 %v2113
        %2555 = vmatpush1.bf16.msra.mxu0 %v2112
        %2556 = vmatprep.subr.bf16.mxu0 %v2117
        %2557 = vmatpush1.bf16.msra.mxu0 %v2116
        %2558 = vmatprep.mubr.bf16.mxu0 %v879
        %2559 = vmatmul.mubr.bf16.gmra.mrb[0].mxu0 %v878
        %v2560 = vpop.f32.mrb[0].mxu0
        %v2561 = vadd.f32 %v2518, %v2560
        %v2562 = vpop.f32.mrb[0].mxu0
        %v2563 = vadd.f32 %v2520, %v2562
        %v2564 = vpop.f32.mrb[0].mxu0
        %v2565 = vadd.f32 %v2522, %v2564
        %v2566 = vpop.f32.mrb[0].mxu0
        %v2567 = vadd.f32 %v2524, %v2566
        %2568 = vdwg.mxu0
        %2569 = vmatprep.subr.bf16.mxu0 %v2121
        %2570 = vmatpush1.bf16.msra.mxu0 %v2120
        %2571 = vmatprep.subr.bf16.mxu0 %v2125
        %2572 = vmatpush1.bf16.msra.mxu0 %v2124
        %2573 = vmatprep.subr.bf16.mxu0 %v2129
        %2574 = vmatpush1.bf16.msra.mxu0 %v2128
        %2575 = vmatprep.subr.bf16.mxu0 %v2133
        %2576 = vmatpush1.bf16.msra.mxu0 %v2132
        %2577 = vmatprep.subr.bf16.mxu0 %v2137
        %2578 = vmatpush1.bf16.msra.mxu0 %v2136
        %2579 = vmatprep.subr.bf16.mxu0 %v2141
        %2580 = vmatpush1.bf16.msra.mxu0 %v2140
        %2581 = vmatprep.subr.bf16.mxu0 %v2145
        %2582 = vmatpush1.bf16.msra.mxu0 %v2144
        %2583 = vmatprep.subr.bf16.mxu0 %v2149
        %2584 = vmatpush1.bf16.msra.mxu0 %v2148
        %2585 = vmatprep.subr.bf16.mxu0 %v2153
        %2586 = vmatpush1.bf16.msra.mxu0 %v2152
        %2587 = vmatprep.subr.bf16.mxu0 %v2157
        %2588 = vmatpush1.bf16.msra.mxu0 %v2156
        %2589 = vmatprep.subr.bf16.mxu0 %v2161
        %2590 = vmatpush1.bf16.msra.mxu0 %v2160
        %2591 = vmatprep.subr.bf16.mxu0 %v2165
        %2592 = vmatpush1.bf16.msra.mxu0 %v2164
        %2593 = vmatprep.subr.bf16.mxu0 %v2169
        %2594 = vmatpush1.bf16.msra.mxu0 %v2168
        %2595 = vmatprep.subr.bf16.mxu0 %v2173
        %2596 = vmatpush1.bf16.msra.mxu0 %v2172
        %2597 = vmatprep.subr.bf16.mxu0 %v2177
        %2598 = vmatpush1.bf16.msra.mxu0 %v2176
        %2599 = vmatprep.subr.bf16.mxu0 %v2181
        %2600 = vmatpush1.bf16.msra.mxu0 %v2180
        %2601 = vmatprep.mubr.bf16.mxu0 %v881
        %2602 = vmatmul.mubr.bf16.gmra.mrb[0].mxu0 %v880
        %v2603 = vpop.f32.mrb[0].mxu0
        %v2604 = vadd.f32 %v2561, %v2603
        %v2605 = vpop.f32.mrb[0].mxu0
        %v2606 = vadd.f32 %v2563, %v2605
        %v2607 = vpop.f32.mrb[0].mxu0
        %v2608 = vadd.f32 %v2565, %v2607
        %v2609 = vpop.f32.mrb[0].mxu0
        %v2610 = vadd.f32 %v2567, %v2609
        %2611 = vdwg.mxu0
        %2612 = vmatprep.subr.bf16.mxu0 %v1931
        %2613 = vmatpush1.bf16.msra.mxu0 %v1930
        %2614 = vmatprep.subr.bf16.mxu0 %v1935
        %2615 = vmatpush1.bf16.msra.mxu0 %v1934
        %2616 = vmatprep.subr.bf16.mxu0 %v1939
        %2617 = vmatpush1.bf16.msra.mxu0 %v1938
        %2618 = vmatprep.subr.bf16.mxu0 %v1943
        %2619 = vmatpush1.bf16.msra.mxu0 %v1942
        %2620 = vmatprep.subr.bf16.mxu0 %v1947
        %2621 = vmatpush1.bf16.msra.mxu0 %v1946
        %2622 = vmatprep.subr.bf16.mxu0 %v1951
        %2623 = vmatpush1.bf16.msra.mxu0 %v1950
        %2624 = vmatprep.subr.bf16.mxu0 %v1955
        %2625 = vmatpush1.bf16.msra.mxu0 %v1954
        %2626 = vmatprep.subr.bf16.mxu0 %v1959
        %2627 = vmatpush1.bf16.msra.mxu0 %v1958
        %2628 = vmatprep.subr.bf16.mxu0 %v1963
        %2629 = vmatpush1.bf16.msra.mxu0 %v1962
        %2630 = vmatprep.subr.bf16.mxu0 %v1967
        %2631 = vmatpush1.bf16.msra.mxu0 %v1966
        %2632 = vmatprep.subr.bf16.mxu0 %v1971
        %2633 = vmatpush1.bf16.msra.mxu0 %v1970
        %2634 = vmatprep.subr.bf16.mxu0 %v1975
        %2635 = vmatpush1.bf16.msra.mxu0 %v1974
        %2636 = vmatprep.subr.bf16.mxu0 %v1979
        %2637 = vmatpush1.bf16.msra.mxu0 %v1978
        %2638 = vmatprep.subr.bf16.mxu0 %v1983
        %2639 = vmatpush1.bf16.msra.mxu0 %v1982
        %2640 = vmatprep.subr.bf16.mxu0 %v1987
        %2641 = vmatpush1.bf16.msra.mxu0 %v1986
        %2642 = vmatprep.subr.bf16.mxu0 %v1991
        %2643 = vmatpush1.bf16.msra.mxu0 %v1990
        %2644 = vmatprep.mubr.bf16.mxu0 %v875
        %2645 = vmatmul.mubr.bf16.gmra.mrb[0].mxu0 %v874
        %v2646 = vpop.f32.mrb[0].mxu0
        %v2647 = vadd.f32 %v1151, %v2646
        %v2648 = vpop.f32.mrb[0].mxu0
        %v2649 = vadd.f32 %v1155, %v2648
        %v2650 = vpop.f32.mrb[0].mxu0
        %v2651 = vadd.f32 %v1151, %v2650
        %v2652 = vpop.f32.mrb[0].mxu0
        %v2653 = vadd.f32 %v1155, %v2652
        %2654 = vdwg.mxu0
        %2655 = vmatprep.subr.bf16.mxu0 %v1995
        %2656 = vmatpush1.bf16.msra.mxu0 %v1994
        %2657 = vmatprep.subr.bf16.mxu0 %v1999
        %2658 = vmatpush1.bf16.msra.mxu0 %v1998
        %2659 = vmatprep.subr.bf16.mxu0 %v2003
        %2660 = vmatpush1.bf16.msra.mxu0 %v2002
        %2661 = vmatprep.subr.bf16.mxu0 %v2007
        %2662 = vmatpush1.bf16.msra.mxu0 %v2006
        %2663 = vmatprep.subr.bf16.mxu0 %v2011
        %2664 = vmatpush1.bf16.msra.mxu0 %v2010
        %2665 = vmatprep.subr.bf16.mxu0 %v2015
        %2666 = vmatpush1.bf16.msra.mxu0 %v2014
        %2667 = vmatprep.subr.bf16.mxu0 %v2019
        %2668 = vmatpush1.bf16.msra.mxu0 %v2018
        %2669 = vmatprep.subr.bf16.mxu0 %v2023
        %2670 = vmatpush1.bf16.msra.mxu0 %v2022
        %2671 = vmatprep.subr.bf16.mxu0 %v2027
        %2672 = vmatpush1.bf16.msra.mxu0 %v2026
        %2673 = vmatprep.subr.bf16.mxu0 %v2031
        %2674 = vmatpush1.bf16.msra.mxu0 %v2030
        %2675 = vmatprep.subr.bf16.mxu0 %v2035
        %2676 = vmatpush1.bf16.msra.mxu0 %v2034
        %2677 = vmatprep.subr.bf16.mxu0 %v2039
        %2678 = vmatpush1.bf16.msra.mxu0 %v2038
        %2679 = vmatprep.subr.bf16.mxu0 %v2043
        %2680 = vmatpush1.bf16.msra.mxu0 %v2042
        %2681 = vmatprep.subr.bf16.mxu0 %v2047
        %2682 = vmatpush1.bf16.msra.mxu0 %v2046
        %2683 = vmatprep.subr.bf16.mxu0 %v2051
        %2684 = vmatpush1.bf16.msra.mxu0 %v2050
        %2685 = vmatprep.subr.bf16.mxu0 %v2055
        %2686 = vmatpush1.bf16.msra.mxu0 %v2054
        %2687 = vmatprep.mubr.bf16.mxu0 %v877
        %2688 = vmatmul.mubr.bf16.gmra.mrb[0].mxu0 %v876
        %v2689 = vpop.f32.mrb[0].mxu0
        %v2690 = vadd.f32 %v2647, %v2689
        %v2691 = vpop.f32.mrb[0].mxu0
        %v2692 = vadd.f32 %v2649, %v2691
        %v2693 = vpop.f32.mrb[0].mxu0
        %v2694 = vadd.f32 %v2651, %v2693
        %v2695 = vpop.f32.mrb[0].mxu0
        %v2696 = vadd.f32 %v2653, %v2695
        %2697 = vdwg.mxu0
        %2698 = vmatprep.subr.bf16.mxu0 %v2059
        %2699 = vmatpush1.bf16.msra.mxu0 %v2058
        %2700 = vmatprep.subr.bf16.mxu0 %v2063
        %2701 = vmatpush1.bf16.msra.mxu0 %v2062
        %2702 = vmatprep.subr.bf16.mxu0 %v2067
        %2703 = vmatpush1.bf16.msra.mxu0 %v2066
        %2704 = vmatprep.subr.bf16.mxu0 %v2071
        %2705 = vmatpush1.bf16.msra.mxu0 %v2070
        %2706 = vmatprep.subr.bf16.mxu0 %v2075
        %2707 = vmatpush1.bf16.msra.mxu0 %v2074
        %2708 = vmatprep.subr.bf16.mxu0 %v2079
        %2709 = vmatpush1.bf16.msra.mxu0 %v2078
        %2710 = vmatprep.subr.bf16.mxu0 %v2083
        %2711 = vmatpush1.bf16.msra.mxu0 %v2082
        %2712 = vmatprep.subr.bf16.mxu0 %v2087
        %2713 = vmatpush1.bf16.msra.mxu0 %v2086
        %2714 = vmatprep.subr.bf16.mxu0 %v2091
        %2715 = vmatpush1.bf16.msra.mxu0 %v2090
        %2716 = vmatprep.subr.bf16.mxu0 %v2095
        %2717 = vmatpush1.bf16.msra.mxu0 %v2094
        %2718 = vmatprep.subr.bf16.mxu0 %v2099
        %2719 = vmatpush1.bf16.msra.mxu0 %v2098
        %2720 = vmatprep.subr.bf16.mxu0 %v2103
        %2721 = vmatpush1.bf16.msra.mxu0 %v2102
        %2722 = vmatprep.subr.bf16.mxu0 %v2107
        %2723 = vmatpush1.bf16.msra.mxu0 %v2106
        %2724 = vmatprep.subr.bf16.mxu0 %v2111
        %2725 = vmatpush1.bf16.msra.mxu0 %v2110
        %2726 = vmatprep.subr.bf16.mxu0 %v2115
        %2727 = vmatpush1.bf16.msra.mxu0 %v2114
        %2728 = vmatprep.subr.bf16.mxu0 %v2119
        %2729 = vmatpush1.bf16.msra.mxu0 %v2118
        %2730 = vmatprep.mubr.bf16.mxu0 %v879
        %2731 = vmatmul.mubr.bf16.gmra.mrb[0].mxu0 %v878
        %v2732 = vpop.f32.mrb[0].mxu0
        %v2733 = vadd.f32 %v2690, %v2732
        %v2734 = vpop.f32.mrb[0].mxu0
        %v2735 = vadd.f32 %v2692, %v2734
        %v2736 = vpop.f32.mrb[0].mxu0
        %v2737 = vadd.f32 %v2694, %v2736
        %v2738 = vpop.f32.mrb[0].mxu0
        %v2739 = vadd.f32 %v2696, %v2738
        %2740 = vdwg.mxu0
        %2741 = vmatprep.subr.bf16.mxu0 %v2123
        %2742 = vmatpush1.bf16.msra.mxu0 %v2122
        %2743 = vmatprep.subr.bf16.mxu0 %v2127
        %2744 = vmatpush1.bf16.msra.mxu0 %v2126
        %2745 = vmatprep.subr.bf16.mxu0 %v2131
        %2746 = vmatpush1.bf16.msra.mxu0 %v2130
        %2747 = vmatprep.subr.bf16.mxu0 %v2135
        %2748 = vmatpush1.bf16.msra.mxu0 %v2134
        %2749 = vmatprep.subr.bf16.mxu0 %v2139
        %2750 = vmatpush1.bf16.msra.mxu0 %v2138
        %2751 = vmatprep.subr.bf16.mxu0 %v2143
        %2752 = vmatpush1.bf16.msra.mxu0 %v2142
        %2753 = vmatprep.subr.bf16.mxu0 %v2147
        %2754 = vmatpush1.bf16.msra.mxu0 %v2146
        %2755 = vmatprep.subr.bf16.mxu0 %v2151
        %2756 = vmatpush1.bf16.msra.mxu0 %v2150
        %2757 = vmatprep.subr.bf16.mxu0 %v2155
        %2758 = vmatpush1.bf16.msra.mxu0 %v2154
        %2759 = vmatprep.subr.bf16.mxu0 %v2159
        %2760 = vmatpush1.bf16.msra.mxu0 %v2158
        %2761 = vmatprep.subr.bf16.mxu0 %v2163
        %2762 = vmatpush1.bf16.msra.mxu0 %v2162
        %2763 = vmatprep.subr.bf16.mxu0 %v2167
        %2764 = vmatpush1.bf16.msra.mxu0 %v2166
        %2765 = vmatprep.subr.bf16.mxu0 %v2171
        %2766 = vmatpush1.bf16.msra.mxu0 %v2170
        %2767 = vmatprep.subr.bf16.mxu0 %v2175
        %2768 = vmatpush1.bf16.msra.mxu0 %v2174
        %2769 = vmatprep.subr.bf16.mxu0 %v2179
        %2770 = vmatpush1.bf16.msra.mxu0 %v2178
        %2771 = vmatprep.subr.bf16.mxu0 %v2183
        %2772 = vmatpush1.bf16.msra.mxu0 %v2182
        %2773 = vmatprep.mubr.bf16.mxu0 %v881
        %2774 = vmatmul.mubr.bf16.gmra.mrb[0].mxu0 %v880
        %v2775 = vpop.f32.mrb[0].mxu0
        %v2776 = vadd.f32 %v2733, %v2775
        %v2777 = vpop.f32.mrb[0].mxu0
        %v2778 = vadd.f32 %v2735, %v2777
        %v2779 = vpop.f32.mrb[0].mxu0
        %v2780 = vadd.f32 %v2737, %v2779
        %v2781 = vpop.f32.mrb[0].mxu0
        %v2782 = vadd.f32 %v2739, %v2781
        %2783 = vdwg.mxu0
        %v2784 = vmax.f32 %v2604, 0.0
        %v2785 = vmax.f32 %v2606, 0.0
        %v2786 = vmax.f32 %v2776, 0.0
        %v2787 = vmax.f32 %v2778, 0.0
        %v2788 = vmax.f32 %v2608, 0.0
        %v2789 = vmax.f32 %v2610, 0.0
        %v2790 = vmax.f32 %v2780, 0.0
        %v2791 = vmax.f32 %v2782, 0.0
        %v2792 = vld [vmem:[#allocation3] sm:$0xff]
        %v2793 = vld [vmem:[#allocation3 + $0x8] sm:$0xff]
        %v2794 = vld [vmem:[%s366] sm:$0xf]
        %v2796 = vlaneseq
        %v2797 = vshrl.u32 %v2796, 7
        %v2798 = vsub.s32 0, %v2797
        %v2799 = vrot.slane %v2794, %v2798
        %v2800 = vlaneseq
        %v2801 = vshrl.u32 %v2800, 7
        %v2802 = vsub.s32 1, %v2801
        %v2803 = vrot.slane %v2794, %v2802
        %v2804 = vlaneseq
        %v2805 = vshrl.u32 %v2804, 7
        %v2806 = vsub.s32 2, %v2805
        %v2807 = vrot.slane %v2794, %v2806
        %v2808 = vlaneseq
        %v2809 = vshrl.u32 %v2808, 7
        %v2810 = vsub.s32 3, %v2809
        %v2811 = vrot.slane %v2794, %v2810
        %v2816 = vmul.f32 %v2784, %v2799
        %v2817 = vmul.f32 %v2785, %v2803
        %v2818 = vmul.f32 %v2786, %v2807
        %v2819 = vmul.f32 %v2787, %v2811
        %v2820 = vmul.f32 %v2788, %v2799
        %v2821 = vmul.f32 %v2789, %v2803
        %v2822 = vmul.f32 %v2790, %v2807
        %v2823 = vmul.f32 %v2791, %v2811
        %v2824 = vadd.f32 %v2816, %v2817
        %v2825 = vadd.f32 %v2824, %v2818
        %v2826 = vadd.f32 %v2825, %v2819
        %2827 = vadd.xlane.f32.xlu0 %v2826
        %v2828 = vpop.xlane.xlu0 %2827
        %v2829 = vadd.f32 %v2820, %v2821
        %v2830 = vadd.f32 %v2829, %v2822
        %v2831 = vadd.f32 %v2830, %v2823
        %2832 = vadd.xlane.f32.xlu0 %v2831
        %v2833 = vpop.xlane.xlu0 %2832
        %v2834 = vadd.f32 %v2792, %v2828
        %v2835 = vadd.f32 %v2793, %v2833
        %vm2836 = vcmask 7168
        %2837 = vst.msk [vmem:[#allocation3] sm:$0xff] %vm2836, %v2834
        %2838 = vst.msk [vmem:[#allocation3 + $0x8] sm:$0xff] %vm2836, %v2835
        %p2839 = scmp.eq.s32.totalorder %s29, 1
        // Predicated region
        $region77: #{tpu_custom_call.1} parent=47 // pred_check
          %p2840 = pneg %p2839
        $region78: #{tpu_custom_call.1} parent=47 // pred_check_branch
          %2842 = sbr.rel (%p2840) target = $region80
        $region79: #{tpu_custom_call.1} parent=47 // pred_region
          %v2843 = vld [vmem:[#allocation3] sm:$0xff]
          %v2844 = vld [vmem:[#allocation3 + $0x8] sm:$0xff]
          %v2845 = vld [vmem:[#allocation4] sm:$0x1]
          %v2847 = vlaneseq
          %v2848 = vshrl.u32 %v2847, 7
          %v2849 = vsub.s32 0, %v2848
          %v2850 = vrot.slane %v2845, %v2849
          %v2852 = vadd.f32 %v2843, %v2850
          %v2853 = vadd.f32 %v2844, %v2850
          %v2854 = vsub.f32 0.0, %v2852
          %v2855 = vmax.f32 %v2854, 0.0
          %v2856 = vand.u32 2147483647, %v2854
          %v2857 = vsub.f32 0.0, %v2856
          %v2858 = vmul.f32 %v2857, 1.442695
          %v2859 = vpow.pop %v2858
          %v2860 = vadd.f32 %v2859, 1.0
          %v2861 = vlog2.pop %v2860
          %v2862 = vmul.f32 %v2861, 0.6931472
          %v2863 = vmul.f32 -0.5, %v2859
          %v2864 = vadd.f32 %v2863, 1.0
          %v2865 = vmul.f32 %v2864, %v2859
          %v2866 = vand.u32 2147483647, %v2859
          %vm2867 = vcmp.lt.f32.partialorder %v2866, 0.0004427343
          %v2868 = vsel %vm2867, %v2865, %v2862
          %v2869 = vadd.f32 %v2855, %v2868
          %v2870 = vmax.f32 %v2853, 0.0
          %v2871 = vand.u32 2147483647, %v2853
          %v2872 = vsub.f32 0.0, %v2871
          %v2873 = vmul.f32 %v2872, 1.442695
          %v2874 = vpow.pop %v2873
          %v2875 = vadd.f32 %v2874, 1.0
          %v2876 = vlog2.pop %v2875
          %v2877 = vmul.f32 %v2876, 0.6931472
          %v2878 = vmul.f32 -0.5, %v2874
          %v2879 = vadd.f32 %v2878, 1.0
          %v2880 = vmul.f32 %v2879, %v2874
          %v2881 = vand.u32 2147483647, %v2874
          %vm2882 = vcmp.lt.f32.partialorder %v2881, 0.0004427343
          %v2883 = vsel %vm2882, %v2880, %v2877
          %v2884 = vadd.f32 %v2870, %v2883
          %v2885 = vadd.f32 %v2869, %v2884
          %v2886 = vsel %vm2836, %v2885, 0.0
          %v2887 = vrot.slane %v2886, 4
          %v2888 = vadd.f32 %v2886, %v2887
          %v2889 = vrot.slane %v2888, 2
          %v2890 = vadd.f32 %v2888, %v2889
          %v2891 = vrot.slane %v2890, 1
          %v2892 = vadd.f32 %v2890, %v2891
          %v2893 = vsub.f32 0.0, %v2892
          %v2894 = vmul.f32 %v2893, 0.125
          %v2895 = vmul.f32 %v2853, 1.442695
          %v2896 = vpow.pop %v2895
          %v2897 = vsub.f32 %v2852, %v2896
          %v2898 = vsel %vm2836, %v2897, 0.0
          %v2899 = vrot.slane %v2898, 4
          %v2900 = vadd.f32 %v2898, %v2899
          %v2901 = vrot.slane %v2900, 2
          %v2902 = vadd.f32 %v2900, %v2901
          %v2903 = vrot.slane %v2902, 1
          %v2904 = vadd.f32 %v2902, %v2903
          %v2905 = vmul.f32 %v2904, 0.125
          %v2906 = vadd.f32 %v2905, 1.0
          %v2907 = vlaneseq
          %v2908 = vand.u32 %v2907, 127
          %vm2909 = vcmp.eq.s32.totalorder %v2908, 0
          %2911 = vset.pattern.permute.xlu0 0
          %2912 = vperm.xlu0 %2911, %v2894
          %v2913 = vpop.permute.xlu0 %2912
          %2916 = vset.pattern.permute.xlu0 0
          %2917 = vperm.xlu0 %2916, %v2906
          %v2918 = vpop.permute.xlu0 %2917
          %v2920 = vsel %vm2909, %v2913, %v2918
          %vm2921 = vcmask 8192
          %2922 = vst.msk [vmem:[#allocation16] sm:$0x1] %vm2921, %v2920
        $region80: #{tpu_custom_call.1} parent=47 // pred_fallthru
          _
        // Predicated region
        $region81: #{tpu_custom_call.1} parent=47 // pred_check
          %p2923 = pneg %p204
        $region82: #{tpu_custom_call.1} parent=47 // pred_check_branch
          %2925 = sbr.rel (%p2923) target = $region84
        $region83: #{tpu_custom_call.1} parent=47 // pred_region
          %s2927 = ssub.s32 16, 16
          %2928 = vsyncadd [#allocation7], %s2927
          %s2930 = sshll.u32 [#allocation16], 4
          %s2931 = int_to_ptr.vmem [resolvable:$true] %s2930
          %2933 = dma.vmem_to_hbm [thread:$0]  %s2931, 16, %s7, [#allocation7]
        $region84: #{tpu_custom_call.1} parent=47 // pred_fallthru
          _
        // Predicated region
        $region85: #{tpu_custom_call.1} parent=47 // pred_check
          %p2934 = pneg %p204
        $region86: #{tpu_custom_call.1} parent=47 // pred_check_branch
          %2936 = sbr.rel (%p2934) target = $region88
        $region87: #{tpu_custom_call.1} parent=47 // pred_region
          %2937 = dma.done [#allocation7], 16
        $region88: #{tpu_custom_call.1} parent=47 // pred_fallthru
          _
      $region48: #{tpu_custom_call.1} parent=5 // pred_fallthru
        _
      %p2938 = scmp.le.s32.totalorder 2, %s24
      // Predicated region
      $region89: #{tpu_custom_call.1} parent=5 // pred_check
        %p2939 = pneg %p2938
      $region90: #{tpu_custom_call.1} parent=5 // pred_check_branch
        %2941 = sbr.rel (%p2939) target = $region92
      $region91: #{tpu_custom_call.1} parent=5 // pred_region
        %s2942 = ssub.s32 %s24, 2
      $region92: #{tpu_custom_call.1} parent=5 // pred_fallthru
        _
    $region6: #{tpu_custom_call.1} parent=1 // loop_footer
      %s28 = sadd.s32 1, %s24
    $region7: #{tpu_custom_call.1} parent=1 // loop_footer_branch
      %23 = sbr.rel target = $region3
    $region8: #{tpu_custom_call.1} parent=1 // loop_exit
      _
    %2943 = vsyncpa [#allocation6], 1
    %s2944 = scalar_lea.sflag [#allocation6], 1
    %2945 = vsyncpa %s2944, 1
    %2946 = vsyncpa [#allocation9], 1
    %2947 = vsyncpa [#allocation12], 1
    %s2948 = scalar_lea.sflag [#allocation12], 1
    %2949 = vsyncpa %s2948, 1
    %2950 = vsyncpa [#allocation15], 1
    %s2951 = scalar_lea.sflag [#allocation15], 1
    %2952 = vsyncpa %s2951, 1
    %2953 = vsyncpa [#allocation7], 1
    %s2954 = scalar_lea.sflag [#allocation7], 1
    %2955 = vsyncpa %s2954, 1

</llo_original>
